<compile_context>
chip_gen: v6e
topology: v6e:2x2x1
jax: 0.10.0
libtpu: 0.0.40
codegen_flags: <defaults>
</compile_context>

<pallas_src>
import jax
import jax.numpy as jnp
from jax.experimental import pallas as pl
from jax.experimental.pallas import tpu as pltpu


DIM1, DIM2, DIM3 = 512, 256, 120   # fixed hidden sizes of Encoder_sc
LANE = 128
SUBLANE = 8


def _round_up(x, m):
    return (x + m - 1) // m * m


def encoder_sc_kernel(x_ref, w1e_ref, w2e_ref, w3e_ref,
                      w1d_ref, w2d_ref, w3d_ref,
                      x_out_ref, z_out_ref):
    """Fused 6-matmul autoencoder forward for one row tile.

    Weights are full (VMEM-resident) blocks in the MXU compute dtype (bf16 by
    default); activations are cast to that dtype just before each dot and
    every dot accumulates in f32, so intermediates never leave on-chip memory.
    """
    cdt = w1e_ref.dtype  # MXU operand dtype (bf16 by default)
    h = jnp.dot(x_ref[...].astype(cdt), w1e_ref[...],
                preferred_element_type=jnp.float32)
    h = jnp.dot(h.astype(cdt), w2e_ref[...], preferred_element_type=jnp.float32)
    z = jnp.dot(h.astype(cdt), w3e_ref[...], preferred_element_type=jnp.float32)
    z_out_ref[...] = z.astype(z_out_ref.dtype)
    h = jnp.dot(z.astype(cdt), w1d_ref[...], preferred_element_type=jnp.float32)
    h = jnp.dot(h.astype(cdt), w2d_ref[...], preferred_element_type=jnp.float32)
    h = jnp.dot(h.astype(cdt), w3d_ref[...], preferred_element_type=jnp.float32)
    x_out_ref[...] = h.astype(x_out_ref.dtype)


def _usable_vmem_bytes():
    """~3/4 of this generation's physical VMEM (128 MiB v5e/v6e, 64 MiB v7x)."""
    try:
        cap = int(pltpu.get_tpu_info().vmem_capacity_bytes)
    except Exception:
        cap = 64 << 20  # conservative default (v7x-sized)
    return max(32 << 20, (cap * 3) // 4)


def _vmem_budget_bytes(tile_n, d_in, weight_bytes):
    # Default pipelining double-buffers every operand.
    io_bytes = 4 * tile_n * (2 * d_in + DIM3)                   # f32 x tile + out tiles
    interm = tile_n * (2 * DIM1 + 2 * DIM2 + DIM3) * (4 + 2)    # f32 acc + bf16 casts
    return 2 * weight_bytes + 2 * io_bytes + interm + (8 << 20)


def _choose_tile_n(n, d_in, weight_bytes, tile_n_max, usable_vmem):
    n8 = _round_up(max(n, 1), SUBLANE)
    # >= 2 grid steps so v7x's "parallel" row axis really splits across both
    # TensorCores; for larger N this lands at 256-512 rows per tile, keeping
    # the 256-wide MXU fed on v6e/v7x and amortizing per-step overhead.
    half = _round_up(-(-n8 // 2), SUBLANE)
    tile_n = max(SUBLANE, min(tile_n_max, half))
    # Shrink the row tile (rather than silently clamping VMEM) if it can't fit.
    while tile_n > SUBLANE and _vmem_budget_bytes(tile_n, d_in, weight_bytes) > usable_vmem:
        tile_n = max(SUBLANE, _round_up(tile_n // 2, SUBLANE))
    return tile_n


def encoder_sc_forward(x, prepared_params, *, tile_n_max=512):
    """x: (N, dim_input) f32.  prepared_params: output of
    prepare_encoder_sc_params (the six weights in PyTorch (in_dim, out_dim)
    layout, cast once to the MXU compute dtype).  Returns (x_recon, z) f32."""
    # TODO(synk): training-mode dropout (F.dropout with p > 0) not implemented;
    # this matches inference / dropout == 0.0, which is the identity.
    w1e, w2e, w3e, w1d, w2d, w3d = prepared_params
    n, d_in = x.shape
    assert w1e.shape == (d_in, DIM1) and w2e.shape == (DIM1, DIM2)
    assert w3e.shape == (DIM2, DIM3) and w1d.shape == (DIM3, DIM2)
    assert w2d.shape == (DIM2, DIM1) and w3d.shape == (DIM1, d_in)

    weight_bytes = sum(int(w.size) * w.dtype.itemsize for w in prepared_params)
    usable_vmem = _usable_vmem_bytes()
    tile_n = _choose_tile_n(n, d_in, weight_bytes, tile_n_max, usable_vmem)
    grid = (pl.cdiv(n, tile_n),)
    # TODO(synk): for very large dim_input the resident W1_en/W3_de alone may
    # exceed usable VMEM; that regime needs a K-grid axis tiling dim_input.

    # Advisory cost estimate (6 chained matmuls, real HBM traffic).
    flops = 2 * grid[0] * tile_n * (d_in * DIM1 + DIM1 * DIM2 + DIM2 * DIM3 +
                                    DIM3 * DIM2 + DIM2 * DIM1 + DIM1 * d_in)
    io_bytes = (int(x.size) * x.dtype.itemsize + weight_bytes +
                4 * n * (d_in + DIM3))
    cost = pl.CostEstimate(flops=flops, transcendentals=0, bytes_accessed=io_bytes)

    vmem_limit = int(min(max(_vmem_budget_bytes(tile_n, d_in, weight_bytes),
                             32 << 20), usable_vmem))

    out_dtype = jnp.float32
    x_out, z_out = pl.pallas_call(
        encoder_sc_kernel,
        out_shape=(jax.ShapeDtypeStruct((n, d_in), out_dtype),
                   jax.ShapeDtypeStruct((n, DIM3), out_dtype)),
        grid_spec=pltpu.PrefetchScalarGridSpec(
            num_scalar_prefetch=0,
            grid=grid,
            in_specs=[
                pl.BlockSpec((tile_n, d_in), lambda i: (i, 0)),   # x row tile
                # Weights: constant index_maps -> VMEM-resident across the
                # grid (no re-DMA).  pipeline_mode=pl.Buffered(1) would halve
                # their footprint; left at the default since the bf16 weights
                # are ~1 MiB total at these hidden sizes.
                pl.BlockSpec((d_in, DIM1), lambda i: (0, 0)),     # W1_en
                pl.BlockSpec((DIM1, DIM2), lambda i: (0, 0)),     # W2_en
                pl.BlockSpec((DIM2, DIM3), lambda i: (0, 0)),     # W3_en
                pl.BlockSpec((DIM3, DIM2), lambda i: (0, 0)),     # W1_de
                pl.BlockSpec((DIM2, DIM1), lambda i: (0, 0)),     # W2_de
                pl.BlockSpec((DIM1, d_in), lambda i: (0, 0)),     # W3_de
            ],
            out_specs=(
                pl.BlockSpec((tile_n, d_in), lambda i: (i, 0)),   # x_recon tile
                pl.BlockSpec((tile_n, DIM3), lambda i: (i, 0)),   # z tile
            ),
        ),
        compiler_params=pltpu.CompilerParams(
            dimension_semantics=("parallel",),
            vmem_limit_bytes=vmem_limit,
        ),
        cost_estimate=cost,
    )(x, w1e, w2e, w3e, w1d, w2d, w3d)

    return x_out, z_out


def init_encoder_sc_params(key, dim_input, dtype=jnp.float32):
    """Xavier-uniform init matching Encoder_sc.reset_parameters(); weights in
    the module's (in_dim, out_dim) layout (torch.mm(x, W), not nn.Linear)."""
    dims = [(dim_input, DIM1), (DIM1, DIM2), (DIM2, DIM3),
            (DIM3, DIM2), (DIM2, DIM1), (DIM1, dim_input)]
    keys = jax.random.split(key, len(dims))
    params = []
    for k, (fi, fo) in zip(keys, dims):
        limit = (6.0 / (fi + fo)) ** 0.5
        params.append(jax.random.uniform(k, (fi, fo), dtype=dtype,
                                         minval=-limit, maxval=limit))
    return tuple(params)


def prepare_encoder_sc_params(params, compute_dtype=jnp.bfloat16):
    """One-time weight prep (hoisted out of the per-call path): cast the six
    weights to the MXU compute dtype (bf16 by default)."""
    return tuple(jnp.asarray(w, dtype=compute_dtype) for w in params)


def _reference_forward(x, params, compute_dtype=None):
    """Plain-JAX reference of the chained matmuls.  If compute_dtype is given,
    mimics the kernel's mixed precision (operands cast, f32 accumulation)."""
    w1e, w2e, w3e, w1d, w2d, w3d = params

    def dot(a, b):
        if compute_dtype is not None:
            a = a.astype(compute_dtype)
            b = b.astype(compute_dtype)
        return jnp.dot(a, b, preferred_element_type=jnp.float32)

    h = dot(dot(x, w1e), w2e)
    z = dot(h, w3e)
    xo = dot(dot(dot(z, w1d), w2d), w3d)
    return xo, z


if __name__ == "__main__":
    key = jax.random.PRNGKey(0)
    k_x, k_w = jax.random.split(key)

    n, dim_input = 64, 200            # small demo shapes
    x = jax.random.normal(k_x, (n, dim_input), dtype=jnp.float32)
    params_f32 = init_encoder_sc_params(k_w, dim_input)
    params = prepare_encoder_sc_params(params_f32)   # one-time bf16 cast / prep

    fwd = jax.jit(encoder_sc_forward)
    x_out, z = jax.block_until_ready(fwd(x, params))

    assert x_out.shape == (n, dim_input) and x_out.dtype == jnp.float32
    assert z.shape == (n, DIM3) and z.dtype == jnp.float32

    # Tight check vs a reference using the same bf16-operand / f32-accumulate
    # arithmetic as the kernel (isolates kernel bugs from precision effects).
    x_ref_mp, z_ref_mp = _reference_forward(x, params, compute_dtype=jnp.bfloat16)
    assert jnp.allclose(z, z_ref_mp, atol=1e-2, rtol=1e-2)
    assert jnp.allclose(x_out, x_ref_mp, atol=1e-2, rtol=1e-2)

    # Loose check vs the full-f32 reference (kernel uses bf16 MXU operands).
    x_ref_f32, z_ref_f32 = _reference_forward(x, params_f32)
    assert jnp.allclose(z, z_ref_f32, atol=6e-2, rtol=6e-2)
    assert jnp.allclose(x_out, x_ref_f32, atol=6e-2, rtol=6e-2)

    print("KERNEL_OK")
</pallas_src>

<mosaic_0001>
module attributes {stable_mosaic.version = 11 : i64} {
  func.func @encoder_sc_kernel(%arg0: i32, %arg1: memref<32x200xf32, #tpu.memory_space<vmem>>, %arg2: memref<200x512xbf16, #tpu.memory_space<vmem>>, %arg3: memref<512x256xbf16, #tpu.memory_space<vmem>>, %arg4: memref<256x120xbf16, #tpu.memory_space<vmem>>, %arg5: memref<120x256xbf16, #tpu.memory_space<vmem>>, %arg6: memref<256x512xbf16, #tpu.memory_space<vmem>>, %arg7: memref<512x200xbf16, #tpu.memory_space<vmem>>, %arg8: memref<32x200xf32, #tpu.memory_space<vmem>>, %arg9: memref<32x120xf32, #tpu.memory_space<vmem>>) attributes {dimension_semantics = [#tpu.dimension_semantics<parallel>], iteration_bounds = array<i64: 2>, scalar_prefetch = 0 : i64, scratch_operands = 0 : i64, tpu.core_type = #tpu.core_type<tc>, window_params = [{transform_indices = @transform_0, window_bounds = array<i64: 32, 200>}, {pipeline_mode = #tpu.pipeline_mode<synchronous>, transform_indices = @transform_1, window_bounds = array<i64: 200, 512>}, {pipeline_mode = #tpu.pipeline_mode<synchronous>, transform_indices = @transform_2, window_bounds = array<i64: 512, 256>}, {pipeline_mode = #tpu.pipeline_mode<synchronous>, transform_indices = @transform_3, window_bounds = array<i64: 256, 120>}, {pipeline_mode = #tpu.pipeline_mode<synchronous>, transform_indices = @transform_4, window_bounds = array<i64: 120, 256>}, {pipeline_mode = #tpu.pipeline_mode<synchronous>, transform_indices = @transform_5, window_bounds = array<i64: 256, 512>}, {pipeline_mode = #tpu.pipeline_mode<synchronous>, transform_indices = @transform_6, window_bounds = array<i64: 512, 200>}, {transform_indices = @transform_7, window_bounds = array<i64: 32, 200>}, {transform_indices = @transform_8, window_bounds = array<i64: 32, 120>}]} {
    %c0 = arith.constant 0 : index
    %c0_0 = arith.constant 0 : index
    %0 = vector.load %arg1[%c0, %c0_0] : memref<32x200xf32, #tpu.memory_space<vmem>>, vector<32x200xf32>
    %1 = arith.truncf %0 : vector<32x200xf32> to vector<32x200xbf16>
    %c0_1 = arith.constant 0 : index
    %c0_2 = arith.constant 0 : index
    %2 = vector.load %arg2[%c0_1, %c0_2] : memref<200x512xbf16, #tpu.memory_space<vmem>>, vector<200x512xbf16>
    %cst = arith.constant dense<0.000000e+00> : vector<32x512xf32>
    %3 = tpu.matmul %1, %2, %cst {dimension_numbers = #tpu.dot_dimension_numbers<[1], [0], [0], [1], [0, 0, 1, 1], [], []>} : vector<32x200xbf16>, vector<200x512xbf16>, vector<32x512xf32> -> vector<32x512xf32>
    %4 = arith.truncf %3 : vector<32x512xf32> to vector<32x512xbf16>
    %c0_3 = arith.constant 0 : index
    %c0_4 = arith.constant 0 : index
    %5 = vector.load %arg3[%c0_3, %c0_4] : memref<512x256xbf16, #tpu.memory_space<vmem>>, vector<512x256xbf16>
    %cst_5 = arith.constant dense<0.000000e+00> : vector<32x256xf32>
    %6 = tpu.matmul %4, %5, %cst_5 {dimension_numbers = #tpu.dot_dimension_numbers<[1], [0], [0], [1], [0, 0, 1, 1], [], []>} : vector<32x512xbf16>, vector<512x256xbf16>, vector<32x256xf32> -> vector<32x256xf32>
    %7 = arith.truncf %6 : vector<32x256xf32> to vector<32x256xbf16>
    %c0_6 = arith.constant 0 : index
    %c0_7 = arith.constant 0 : index
    %8 = vector.load %arg4[%c0_6, %c0_7] : memref<256x120xbf16, #tpu.memory_space<vmem>>, vector<256x120xbf16>
    %cst_8 = arith.constant dense<0.000000e+00> : vector<32x120xf32>
    %9 = tpu.matmul %7, %8, %cst_8 {dimension_numbers = #tpu.dot_dimension_numbers<[1], [0], [0], [1], [0, 0, 1, 1], [], []>} : vector<32x256xbf16>, vector<256x120xbf16>, vector<32x120xf32> -> vector<32x120xf32>
    %c0_9 = arith.constant 0 : index
    %c0_10 = arith.constant 0 : index
    %10 = vector.load %arg9[%c0_9, %c0_10] : memref<32x120xf32, #tpu.memory_space<vmem>>, vector<32x120xf32>
    tpu.vector_store %arg9[%c0_9, %c0_10], %9 {strides = array<i32>} : memref<32x120xf32, #tpu.memory_space<vmem>>, vector<32x120xf32>,
    %11 = arith.truncf %9 : vector<32x120xf32> to vector<32x120xbf16>
    %c0_11 = arith.constant 0 : index
    %c0_12 = arith.constant 0 : index
    %12 = vector.load %arg5[%c0_11, %c0_12] : memref<120x256xbf16, #tpu.memory_space<vmem>>, vector<120x256xbf16>
    %cst_13 = arith.constant dense<0.000000e+00> : vector<32x256xf32>
    %13 = tpu.matmul %11, %12, %cst_13 {dimension_numbers = #tpu.dot_dimension_numbers<[1], [0], [0], [1], [0, 0, 1, 1], [], []>} : vector<32x120xbf16>, vector<120x256xbf16>, vector<32x256xf32> -> vector<32x256xf32>
    %14 = arith.truncf %13 : vector<32x256xf32> to vector<32x256xbf16>
    %c0_14 = arith.constant 0 : index
    %c0_15 = arith.constant 0 : index
    %15 = vector.load %arg6[%c0_14, %c0_15] : memref<256x512xbf16, #tpu.memory_space<vmem>>, vector<256x512xbf16>
    %cst_16 = arith.constant dense<0.000000e+00> : vector<32x512xf32>
    %16 = tpu.matmul %14, %15, %cst_16 {dimension_numbers = #tpu.dot_dimension_numbers<[1], [0], [0], [1], [0, 0, 1, 1], [], []>} : vector<32x256xbf16>, vector<256x512xbf16>, vector<32x512xf32> -> vector<32x512xf32>
    %17 = arith.truncf %16 : vector<32x512xf32> to vector<32x512xbf16>
    %c0_17 = arith.constant 0 : index
    %c0_18 = arith.constant 0 : index
    %18 = vector.load %arg7[%c0_17, %c0_18] : memref<512x200xbf16, #tpu.memory_space<vmem>>, vector<512x200xbf16>
    %cst_19 = arith.constant dense<0.000000e+00> : vector<32x200xf32>
    %19 = tpu.matmul %17, %18, %cst_19 {dimension_numbers = #tpu.dot_dimension_numbers<[1], [0], [0], [1], [0, 0, 1, 1], [], []>} : vector<32x512xbf16>, vector<512x200xbf16>, vector<32x200xf32> -> vector<32x200xf32>
    %c0_20 = arith.constant 0 : index
    %c0_21 = arith.constant 0 : index
    %20 = vector.load %arg8[%c0_20, %c0_21] : memref<32x200xf32, #tpu.memory_space<vmem>>, vector<32x200xf32>
    tpu.vector_store %arg8[%c0_20, %c0_21], %19 {strides = array<i32>} : memref<32x200xf32, #tpu.memory_space<vmem>>, vector<32x200xf32>,
    return
  }
  func.func @transform_0(%arg0: i32) -> (i32, i32) {
    %c0_i32 = arith.constant 0 : i32
    %c0_i32_0 = arith.constant 0 : i32
    return %arg0, %c0_i32 : i32, i32
  }
  func.func @transform_1(%arg0: i32) -> (i32, i32) {
    %c0_i32 = arith.constant 0 : i32
    %c0_i32_0 = arith.constant 0 : i32
    %c0_i32_1 = arith.constant 0 : i32
    return %c0_i32, %c0_i32_0 : i32, i32
  }
  func.func @transform_2(%arg0: i32) -> (i32, i32) {
    %c0_i32 = arith.constant 0 : i32
    %c0_i32_0 = arith.constant 0 : i32
    %c0_i32_1 = arith.constant 0 : i32
    return %c0_i32, %c0_i32_0 : i32, i32
  }
  func.func @transform_3(%arg0: i32) -> (i32, i32) {
    %c0_i32 = arith.constant 0 : i32
    %c0_i32_0 = arith.constant 0 : i32
    %c0_i32_1 = arith.constant 0 : i32
    return %c0_i32, %c0_i32_0 : i32, i32
  }
  func.func @transform_4(%arg0: i32) -> (i32, i32) {
    %c0_i32 = arith.constant 0 : i32
    %c0_i32_0 = arith.constant 0 : i32
    %c0_i32_1 = arith.constant 0 : i32
    return %c0_i32, %c0_i32_0 : i32, i32
  }
  func.func @transform_5(%arg0: i32) -> (i32, i32) {
    %c0_i32 = arith.constant 0 : i32
    %c0_i32_0 = arith.constant 0 : i32
    %c0_i32_1 = arith.constant 0 : i32
    return %c0_i32, %c0_i32_0 : i32, i32
  }
  func.func @transform_6(%arg0: i32) -> (i32, i32) {
    %c0_i32 = arith.constant 0 : i32
    %c0_i32_0 = arith.constant 0 : i32
    %c0_i32_1 = arith.constant 0 : i32
    return %c0_i32, %c0_i32_0 : i32, i32
  }
  func.func @transform_7(%arg0: i32) -> (i32, i32) {
    %c0_i32 = arith.constant 0 : i32
    %c0_i32_0 = arith.constant 0 : i32
    return %arg0, %c0_i32 : i32, i32
  }
  func.func @transform_8(%arg0: i32) -> (i32, i32) {
    %c0_i32 = arith.constant 0 : i32
    %c0_i32_0 = arith.constant 0 : i32
    return %arg0, %c0_i32 : i32, i32
  }
}

</mosaic_0001>

<llo_original>
// kernel: encoder_sc_forward.1
$region0: #{encoder_sc_forward.1}
  #allocation0 [shape = 'u32[]', space=smem, size = 0x4, offset = 0x4, fixed_abs, tag = 'smem constant byte address 0x4 - core index']
  #allocation1 [shape = 'u32[144,128]{1,0:T(1,128)}', space=vmem, size = 0x12000, scoped, tag = 'internal scratch']
  %s0 = inlined_call_operand.vmem [shape: f32[64,200], index: 0, kind: input, shape index: {}]
  %s1 = inlined_call_operand.hbm [shape: bf16[200,512], index: 1, kind: input, shape index: {}]
  %s2 = inlined_call_operand.vmem [shape: bf16[512,256], index: 2, kind: input, shape index: {}]
  %s3 = inlined_call_operand.vmem [shape: bf16[256,120], index: 3, kind: input, shape index: {}]
  %s4 = inlined_call_operand.hbm [shape: bf16[120,256], index: 4, kind: input, shape index: {}]
  %s5 = inlined_call_operand.vmem [shape: bf16[256,512], index: 5, kind: input, shape index: {}]
  %s6 = inlined_call_operand.vmem [shape: bf16[512,200], index: 6, kind: input, shape index: {}]
  %s7 = inlined_call_operand.hbm [shape: f32[64,200], index: 7, kind: output, shape index: {0}]
  %s8 = inlined_call_operand.hbm [shape: f32[64,120], index: 8, kind: output, shape index: {1}]
  %9 = xla_tuple %s7, %s8
  %s10 = sld [smem:[#allocation0]]
  $region77: #{encoder_sc_forward.1} parent=0
    _
  %s12 = ssub.s32 1, %s10
  %s13 = scalar_select 0, %s12, %s10
  $region1: #{encoder_sc_forward.1} parent=0
    #allocation2 [shape = 'u8[204800]{0}', space=vmem, size = 0x32000, scoped, tag = 'input window, operand 1, single buffered']
    #allocation3 [shape = 's32[2]{0}', space=sflag, size = 0x8, scoped, tag = 'scoped memory for encoder_sc_forward.1']
    #allocation4 [shape = 's32[2]{0}', space=sflag, size = 0x8, scoped, tag = 'scoped memory for encoder_sc_forward.1']
    #allocation5 [shape = 'u8[61440]{0}', space=vmem, size = 0xf000, scoped, tag = 'input window, operand 4, single buffered']
    #allocation6 [shape = 's32[1]{0}', space=sflag, size = 0x4, scoped, tag = 'scoped memory for encoder_sc_forward.1']
    #allocation7 [shape = 'u8[65536]{0}', space=vmem, size = 0x10000, scoped, tag = 'output window, operand 0']
    #allocation8 [shape = 'u8[32768]{0}', space=vmem, size = 0x8000, scoped, tag = 'output window, operand 1']
    #allocation9 [shape = 's32[2]{0}', space=sflag, size = 0x8, scoped, tag = 'scoped memory for encoder_sc_forward.1']
    %14 = vsyncpa [#allocation3], 0
    %15 = vsyncpa [#allocation6], 0
    %16 = vsyncpa [#allocation4], 0
    %s17 = scalar_lea.sflag [#allocation4], 1
    %18 = vsyncpa %s17, 0
    %19 = vsyncpa [#allocation9], 0
    %s20 = scalar_lea.sflag [#allocation9], 1
    %21 = vsyncpa %s20, 0
    loop: start=0, step=1, limit=4
    $region2: #{encoder_sc_forward.1} parent=1 // loop_pre_header
      _
    $region3: #{encoder_sc_forward.1} parent=1 // loop_header
      %s23 = sphi 0, %s27
      %p24 = scmp.ge.s32.totalorder %s23, 4
      %s33 = sphi 0, %s35
      %s36 = sphi 0, %s33
      %s37 = sphi 0, %s36
      %s53 = sphi 0, %s37
      %s57 = sphi 0, %s57
      %s59 = sphi 0, %s57
      %s60 = sphi 0, %s59
      %s74 = sphi 0, %s60
      %s78 = sphi 0, %s78
      %s80 = sphi 0, %s78
      %s81 = sphi 0, %s80
      %s95 = sphi 0, %s81
      %s99 = sphi 0, %s99
      %s101 = sphi 0, %s99
      %s102 = sphi 0, %s101
      %s116 = sphi 0, %s102
      %s120 = sphi 0, %s120
      %s122 = sphi 0, %s120
      %s123 = sphi 0, %s122
      %s137 = sphi 0, %s123
      %s141 = sphi 0, %s141
      %s143 = sphi 0, %s141
      %s144 = sphi 0, %s143
      %s158 = sphi 0, %s144
      %s162 = sphi 0, %s162
      %s164 = sphi 0, %s162
      %s165 = sphi 0, %s164
      %s179 = sphi 0, %s165
      %s185 = sphi 0, %s187
      %s188 = sphi 0, %s185
      %s189 = sphi 0, %s188
      %s205 = sphi 0, %s189
      %s211 = sphi 0, %s213
      %s214 = sphi 0, %s211
      %s215 = sphi 0, %s214
      %s231 = sphi 0, %s215
    $region4: #{encoder_sc_forward.1} parent=1 // loop_header_branch
      %26 = sbr.rel (%p24) target = $region8
    $region5: #{encoder_sc_forward.1} parent=1 // loop_body
      %s28 = ssub.s32 %s23, 1
      %s29 = ssub.s32 %s23, 2
      %s30 = sadd.s32 %s23, 1
      %s31 = ssub.s32 %s23, %s30
      %p32 = scmp.eq.s32.totalorder %s31, 0
      %s34 = sadd.s32 %s33, 1
      %s35 = scalar_select %p32, %s33, %s34
      %p38 = pneg %p32
      %p39 = scmp.eq.s32.totalorder %s23, 1
      %p40 = por %p38, %p39
      %p41 = scmp.ne.s32.totalorder %s33, %s36
      %p42 = scmp.eq.s32.totalorder %s23, 0
      %p43 = por %p41, %p42
      %p44 = scmp.ne.s32.totalorder %s33, %s36
      %p45 = scmp.eq.s32.totalorder %s28, 1
      %p46 = por %p44, %p45
      %p47 = scmp.ne.s32.totalorder %s36, %s37
      %p48 = scmp.eq.s32.totalorder %s28, 0
      %p49 = por %p47, %p48
      %p50 = scmp.ne.s32.totalorder %s36, %s37
      %p51 = scmp.eq.s32.totalorder %s29, 1
      %p52 = por %p50, %p51
      %p54 = scmp.ne.s32.totalorder %s37, %s53
      %p55 = scmp.eq.s32.totalorder %s29, 0
      %p56 = por %p54, %p55
      %s58 = sadd.s32 %s57, 1
      %p61 = scmp.eq.s32.totalorder %s23, 1
      %p62 = scmp.ne.s32.totalorder %s57, %s59
      %p63 = scmp.eq.s32.totalorder %s23, 0
      %p64 = por %p62, %p63
      %p65 = scmp.ne.s32.totalorder %s57, %s59
      %p66 = scmp.eq.s32.totalorder %s28, 1
      %p67 = por %p65, %p66
      %p68 = scmp.ne.s32.totalorder %s59, %s60
      %p69 = scmp.eq.s32.totalorder %s28, 0
      %p70 = por %p68, %p69
      %p71 = scmp.ne.s32.totalorder %s59, %s60
      %p72 = scmp.eq.s32.totalorder %s29, 1
      %p73 = por %p71, %p72
      %p75 = scmp.ne.s32.totalorder %s60, %s74
      %p76 = scmp.eq.s32.totalorder %s29, 0
      %p77 = por %p75, %p76
      %s79 = sadd.s32 %s78, 1
      %p82 = scmp.eq.s32.totalorder %s23, 1
      %p83 = scmp.ne.s32.totalorder %s78, %s80
      %p84 = scmp.eq.s32.totalorder %s23, 0
      %p85 = por %p83, %p84
      %p86 = scmp.ne.s32.totalorder %s78, %s80
      %p87 = scmp.eq.s32.totalorder %s28, 1
      %p88 = por %p86, %p87
      %p89 = scmp.ne.s32.totalorder %s80, %s81
      %p90 = scmp.eq.s32.totalorder %s28, 0
      %p91 = por %p89, %p90
      %p92 = scmp.ne.s32.totalorder %s80, %s81
      %p93 = scmp.eq.s32.totalorder %s29, 1
      %p94 = por %p92, %p93
      %p96 = scmp.ne.s32.totalorder %s81, %s95
      %p97 = scmp.eq.s32.totalorder %s29, 0
      %p98 = por %p96, %p97
      %s100 = sadd.s32 %s99, 1
      %p103 = scmp.eq.s32.totalorder %s23, 1
      %p104 = scmp.ne.s32.totalorder %s99, %s101
      %p105 = scmp.eq.s32.totalorder %s23, 0
      %p106 = por %p104, %p105
      %p107 = scmp.ne.s32.totalorder %s99, %s101
      %p108 = scmp.eq.s32.totalorder %s28, 1
      %p109 = por %p107, %p108
      %p110 = scmp.ne.s32.totalorder %s101, %s102
      %p111 = scmp.eq.s32.totalorder %s28, 0
      %p112 = por %p110, %p111
      %p113 = scmp.ne.s32.totalorder %s101, %s102
      %p114 = scmp.eq.s32.totalorder %s29, 1
      %p115 = por %p113, %p114
      %p117 = scmp.ne.s32.totalorder %s102, %s116
      %p118 = scmp.eq.s32.totalorder %s29, 0
      %p119 = por %p117, %p118
      %s121 = sadd.s32 %s120, 1
      %p124 = scmp.eq.s32.totalorder %s23, 1
      %p125 = scmp.ne.s32.totalorder %s120, %s122
      %p126 = scmp.eq.s32.totalorder %s23, 0
      %p127 = por %p125, %p126
      %p128 = scmp.ne.s32.totalorder %s120, %s122
      %p129 = scmp.eq.s32.totalorder %s28, 1
      %p130 = por %p128, %p129
      %p131 = scmp.ne.s32.totalorder %s122, %s123
      %p132 = scmp.eq.s32.totalorder %s28, 0
      %p133 = por %p131, %p132
      %p134 = scmp.ne.s32.totalorder %s122, %s123
      %p135 = scmp.eq.s32.totalorder %s29, 1
      %p136 = por %p134, %p135
      %p138 = scmp.ne.s32.totalorder %s123, %s137
      %p139 = scmp.eq.s32.totalorder %s29, 0
      %p140 = por %p138, %p139
      %s142 = sadd.s32 %s141, 1
      %p145 = scmp.eq.s32.totalorder %s23, 1
      %p146 = scmp.ne.s32.totalorder %s141, %s143
      %p147 = scmp.eq.s32.totalorder %s23, 0
      %p148 = por %p146, %p147
      %p149 = scmp.ne.s32.totalorder %s141, %s143
      %p150 = scmp.eq.s32.totalorder %s28, 1
      %p151 = por %p149, %p150
      %p152 = scmp.ne.s32.totalorder %s143, %s144
      %p153 = scmp.eq.s32.totalorder %s28, 0
      %p154 = por %p152, %p153
      %p155 = scmp.ne.s32.totalorder %s143, %s144
      %p156 = scmp.eq.s32.totalorder %s29, 1
      %p157 = por %p155, %p156
      %p159 = scmp.ne.s32.totalorder %s144, %s158
      %p160 = scmp.eq.s32.totalorder %s29, 0
      %p161 = por %p159, %p160
      %s163 = sadd.s32 %s162, 1
      %p166 = scmp.eq.s32.totalorder %s23, 1
      %p167 = scmp.ne.s32.totalorder %s162, %s164
      %p168 = scmp.eq.s32.totalorder %s23, 0
      %p169 = por %p167, %p168
      %p170 = scmp.ne.s32.totalorder %s162, %s164
      %p171 = scmp.eq.s32.totalorder %s28, 1
      %p172 = por %p170, %p171
      %p173 = scmp.ne.s32.totalorder %s164, %s165
      %p174 = scmp.eq.s32.totalorder %s28, 0
      %p175 = por %p173, %p174
      %p176 = scmp.ne.s32.totalorder %s164, %s165
      %p177 = scmp.eq.s32.totalorder %s29, 1
      %p178 = por %p176, %p177
      %p180 = scmp.ne.s32.totalorder %s165, %s179
      %p181 = scmp.eq.s32.totalorder %s29, 0
      %p182 = por %p180, %p181
      %s183 = ssub.s32 %s23, %s30
      %p184 = scmp.eq.s32.totalorder %s183, 0
      %s186 = sadd.s32 %s185, 1
      %s187 = scalar_select %p184, %s185, %s186
      %p190 = pneg %p184
      %p191 = scmp.eq.s32.totalorder %s23, 1
      %p192 = por %p190, %p191
      %p193 = scmp.ne.s32.totalorder %s185, %s188
      %p194 = scmp.eq.s32.totalorder %s23, 0
      %p195 = por %p193, %p194
      %p196 = scmp.ne.s32.totalorder %s185, %s188
      %p197 = scmp.eq.s32.totalorder %s28, 1
      %p198 = por %p196, %p197
      %p199 = scmp.ne.s32.totalorder %s188, %s189
      %p200 = scmp.eq.s32.totalorder %s28, 0
      %p201 = por %p199, %p200
      %p202 = scmp.ne.s32.totalorder %s188, %s189
      %p203 = scmp.eq.s32.totalorder %s29, 1
      %p204 = por %p202, %p203
      %p206 = scmp.ne.s32.totalorder %s189, %s205
      %p207 = scmp.eq.s32.totalorder %s29, 0
      %p208 = por %p206, %p207
      %s209 = ssub.s32 %s23, %s30
      %p210 = scmp.eq.s32.totalorder %s209, 0
      %s212 = sadd.s32 %s211, 1
      %s213 = scalar_select %p210, %s211, %s212
      %p216 = pneg %p210
      %p217 = scmp.eq.s32.totalorder %s23, 1
      %p218 = por %p216, %p217
      %p219 = scmp.ne.s32.totalorder %s211, %s214
      %p220 = scmp.eq.s32.totalorder %s23, 0
      %p221 = por %p219, %p220
      %p222 = scmp.ne.s32.totalorder %s211, %s214
      %p223 = scmp.eq.s32.totalorder %s28, 1
      %p224 = por %p222, %p223
      %p225 = scmp.ne.s32.totalorder %s214, %s215
      %p226 = scmp.eq.s32.totalorder %s28, 0
      %p227 = por %p225, %p226
      %p228 = scmp.ne.s32.totalorder %s214, %s215
      %p229 = scmp.eq.s32.totalorder %s29, 1
      %p230 = por %p228, %p229
      %p232 = scmp.ne.s32.totalorder %s215, %s231
      %p233 = scmp.eq.s32.totalorder %s29, 0
      %p234 = por %p232, %p233
      %p235 = scmp.le.s32.totalorder 1, %s23
      %p236 = scmp.lt.s32.totalorder %s23, 3
      %p237 = pnand %p235, %p236
      %p238 = pneg %p237
      // Predicated region
      $region9: #{encoder_sc_forward.1} parent=5 // pred_check
        _
      $region10: #{encoder_sc_forward.1} parent=5 // pred_check_branch
        %240 = sbr.rel (%p237) target = $region12
      $region11: #{encoder_sc_forward.1} parent=5 // pred_region
        %s241 = ssub.s32 %s23, 1
        // Predicated region
        $region13: #{encoder_sc_forward.1} parent=11 // pred_check
          %p242 = pneg %p70
        $region14: #{encoder_sc_forward.1} parent=11 // pred_check_branch
          %244 = sbr.rel (%p242) target = $region16
        $region15: #{encoder_sc_forward.1} parent=11 // pred_region
          %s246 = ssub.s32 6400, 6400
          %247 = vsyncadd [#allocation3], %s246
          %s248 = sshll.u32 [#allocation2], 4
          %s249 = int_to_ptr.vmem [resolvable:$true] %s248
          %254 = dma.hbm_to_vmem [thread:$0]  %s1, 6400, %s249, [#allocation3], 256, 256, 16
        $region16: #{encoder_sc_forward.1} parent=11 // pred_fallthru
          _
        // Predicated region
        $region17: #{encoder_sc_forward.1} parent=11 // pred_check
          %p255 = pneg %p91
        $region18: #{encoder_sc_forward.1} parent=11 // pred_check_branch
          %257 = sbr.rel (%p255) target = $region20
        $region19: #{encoder_sc_forward.1} parent=11 // pred_region
          _
        $region20: #{encoder_sc_forward.1} parent=11 // pred_fallthru
          _
        // Predicated region
        $region21: #{encoder_sc_forward.1} parent=11 // pred_check
          %p258 = pneg %p112
        $region22: #{encoder_sc_forward.1} parent=11 // pred_check_branch
          %260 = sbr.rel (%p258) target = $region24
        $region23: #{encoder_sc_forward.1} parent=11 // pred_region
          _
        $region24: #{encoder_sc_forward.1} parent=11 // pred_fallthru
          _
        // Predicated region
        $region25: #{encoder_sc_forward.1} parent=11 // pred_check
          %p261 = pneg %p133
        $region26: #{encoder_sc_forward.1} parent=11 // pred_check_branch
          %263 = sbr.rel (%p261) target = $region28
        $region27: #{encoder_sc_forward.1} parent=11 // pred_region
          %s265 = ssub.s32 1920, 1920
          %266 = vsyncadd [#allocation6], %s265
          %s267 = sshll.u32 [#allocation5], 4
          %s268 = int_to_ptr.vmem [resolvable:$true] %s267
          %273 = dma.hbm_to_vmem [thread:$0]  %s4, 1920, %s268, [#allocation6], 128, 128, 8
        $region28: #{encoder_sc_forward.1} parent=11 // pred_fallthru
          _
        // Predicated region
        $region29: #{encoder_sc_forward.1} parent=11 // pred_check
          %p274 = pneg %p154
        $region30: #{encoder_sc_forward.1} parent=11 // pred_check_branch
          %276 = sbr.rel (%p274) target = $region32
        $region31: #{encoder_sc_forward.1} parent=11 // pred_region
          _
        $region32: #{encoder_sc_forward.1} parent=11 // pred_fallthru
          _
        // Predicated region
        $region33: #{encoder_sc_forward.1} parent=11 // pred_check
          %p277 = pneg %p175
        $region34: #{encoder_sc_forward.1} parent=11 // pred_check_branch
          %279 = sbr.rel (%p277) target = $region36
        $region35: #{encoder_sc_forward.1} parent=11 // pred_region
          _
        $region36: #{encoder_sc_forward.1} parent=11 // pred_fallthru
          _
      $region12: #{encoder_sc_forward.1} parent=5 // pred_fallthru
        _
      %p280 = scmp.lt.s32.totalorder %s23, 2
      // Predicated region
      $region37: #{encoder_sc_forward.1} parent=5 // pred_check
        %p281 = pneg %p280
      $region38: #{encoder_sc_forward.1} parent=5 // pred_check_branch
        %283 = sbr.rel (%p281) target = $region40
      $region39: #{encoder_sc_forward.1} parent=5 // pred_region
        // Predicated region
        $region41: #{encoder_sc_forward.1} parent=39 // pred_check
          %p284 = pneg %p43
        $region42: #{encoder_sc_forward.1} parent=39 // pred_check_branch
          %286 = sbr.rel (%p284) target = $region44
        $region43: #{encoder_sc_forward.1} parent=39 // pred_region
          %s287 = smul.u32 4, %s23
          %p288 = scmp.lt.s32.totalorder %s287, 7
          %s289 = scalar_select %p288, %s287, 7
          %s290 = smul.addr %s289, 2
          %s291 = smul.addr %s290, 8
          %s292 = scalar_lea.vmem %s0, %s291
          %s293 = smul.u32 4, %s23
        $region44: #{encoder_sc_forward.1} parent=39 // pred_fallthru
          _
      $region40: #{encoder_sc_forward.1} parent=5 // pred_fallthru
        _
      %p294 = scmp.le.s32.totalorder 1, %s23
      %p295 = scmp.lt.s32.totalorder %s23, 3
      %p296 = pnand %p294, %p295
      %p297 = pneg %p296
      // Predicated region
      $region45: #{encoder_sc_forward.1} parent=5 // pred_check
        _
      $region46: #{encoder_sc_forward.1} parent=5 // pred_check_branch
        %299 = sbr.rel (%p296) target = $region48
      $region47: #{encoder_sc_forward.1} parent=5 // pred_region
        %s300 = ssub.s32 %s23, 1
        // Predicated region
        $region49: #{encoder_sc_forward.1} parent=47 // pred_check
          %p301 = pneg %p70
        $region50: #{encoder_sc_forward.1} parent=47 // pred_check_branch
          %303 = sbr.rel (%p301) target = $region52
        $region51: #{encoder_sc_forward.1} parent=47 // pred_region
          %304 = dma.done [#allocation3], 6400
        $region52: #{encoder_sc_forward.1} parent=47 // pred_fallthru
          _
        // Predicated region
        $region53: #{encoder_sc_forward.1} parent=47 // pred_check
          %p305 = pneg %p133
        $region54: #{encoder_sc_forward.1} parent=47 // pred_check_branch
          %307 = sbr.rel (%p305) target = $region56
        $region55: #{encoder_sc_forward.1} parent=47 // pred_region
          %308 = dma.done [#allocation6], 1920
        $region56: #{encoder_sc_forward.1} parent=47 // pred_fallthru
          _
        %s309 = smul.u32 4, %s28
        %p310 = scmp.lt.s32.totalorder %s309, 7
        %s311 = scalar_select %p310, %s309, 7
        %s312 = smul.addr %s311, 2
        %s313 = smul.addr %s312, 8
        %s314 = scalar_lea.vmem %s0, %s313
        %p315 = pneg %p49
        %p316 = pneg %p46
        %p317 = pneg %p70
        %p318 = pneg %p67
        %p319 = pneg %p91
        %p320 = pneg %p88
        %p321 = pneg %p112
        %p322 = pneg %p109
        %p323 = pneg %p133
        %p324 = pneg %p130
        %p325 = pneg %p154
        %p326 = pneg %p151
        %p327 = pneg %p175
        %p328 = pneg %p172
        %p329 = pneg %p201
        %p330 = pneg %p198
        %s331 = sand.u32 %s188, 1
        %s332 = scalar_lea.sflag [#allocation4], %s331
        %s333 = sand.u32 %s188, 1
        %s334 = smul.addr %s333, 64
        %s335 = scalar_lea.vmem [#allocation7], %s334
        %p336 = pneg %p227
        %p337 = pneg %p224
        %s338 = sand.u32 %s214, 1
        %s339 = scalar_lea.sflag [#allocation9], %s338
        %s340 = sand.u32 %s214, 1
        %s341 = smul.addr %s340, 32
        %s342 = scalar_lea.vmem [#allocation8], %s341
        %s343 = smul.u32 4, %s28
        %p344 = scmp.lt.s32.totalorder %s343, 7
        %s345 = scalar_select %p344, %s343, 7
        %s346 = smul.addr %s345, 2
        %s347 = smul.addr %s346, 8
        %s348 = scalar_lea.vmem %s0, %s347
        %s349 = smul.u32 4, %s28
        %s350 = smul.u32 4, %s28
        %s351 = smul.u32 4, %s28
        %v353 = vld [vmem:[%s348] sm:$0xff]
        %v354 = vld [vmem:[%s348 + $0x8] sm:$0xff]
        %v355 = vld [vmem:[%s348 + $0x10] sm:$0xff]
        %v356 = vld [vmem:[%s348 + $0x18] sm:$0xff]
        %v357 = vld [vmem:[%s348 + $0x20] sm:$0xff]
        %v358 = vld [vmem:[%s348 + $0x28] sm:$0xff]
        %v359 = vld [vmem:[%s348 + $0x30] sm:$0xff]
        %v360 = vld [vmem:[%s348 + $0x38] sm:$0xff]
        %v361 = vpack.c.bf16 %v355, %v353
        %v362 = vpack.c.bf16 %v356, %v354
        %v363 = vpack.c.bf16 %v359, %v357
        %v364 = vpack.c.bf16 %v360, %v358
        %v365 = vld [vmem:[#allocation2] sm:$0xff]
        %v366 = vld [vmem:[#allocation2 + $0x8] sm:$0xff]
        %v367 = vld [vmem:[#allocation2 + $0x10] sm:$0xff]
        %v368 = vld [vmem:[#allocation2 + $0x18] sm:$0xff]
        %v369 = vld [vmem:[#allocation2 + $0x20] sm:$0xff]
        %v370 = vld [vmem:[#allocation2 + $0x28] sm:$0xff]
        %v371 = vld [vmem:[#allocation2 + $0x30] sm:$0xff]
        %v372 = vld [vmem:[#allocation2 + $0x38] sm:$0xff]
        %v373 = vld [vmem:[#allocation2 + $0x40] sm:$0xff]
        %v374 = vld [vmem:[#allocation2 + $0x48] sm:$0xff]
        %v375 = vld [vmem:[#allocation2 + $0x50] sm:$0xff]
        %v376 = vld [vmem:[#allocation2 + $0x58] sm:$0xff]
        %v377 = vld [vmem:[#allocation2 + $0x60] sm:$0xff]
        %v378 = vld [vmem:[#allocation2 + $0x68] sm:$0xff]
        %v379 = vld [vmem:[#allocation2 + $0x70] sm:$0xff]
        %v380 = vld [vmem:[#allocation2 + $0x78] sm:$0xff]
        %v381 = vld [vmem:[#allocation2 + $0x80] sm:$0xff]
        %v382 = vld [vmem:[#allocation2 + $0x88] sm:$0xff]
        %v383 = vld [vmem:[#allocation2 + $0x90] sm:$0xff]
        %v384 = vld [vmem:[#allocation2 + $0x98] sm:$0xff]
        %v385 = vld [vmem:[#allocation2 + $0xa0] sm:$0xff]
        %v386 = vld [vmem:[#allocation2 + $0xa8] sm:$0xff]
        %v387 = vld [vmem:[#allocation2 + $0xb0] sm:$0xff]
        %v388 = vld [vmem:[#allocation2 + $0xb8] sm:$0xff]
        %v389 = vld [vmem:[#allocation2 + $0xc0] sm:$0xff]
        %v390 = vld [vmem:[#allocation2 + $0xc8] sm:$0xff]
        %v391 = vld [vmem:[#allocation2 + $0xd0] sm:$0xff]
        %v392 = vld [vmem:[#allocation2 + $0xd8] sm:$0xff]
        %v393 = vld [vmem:[#allocation2 + $0xe0] sm:$0xff]
        %v394 = vld [vmem:[#allocation2 + $0xe8] sm:$0xff]
        %v395 = vld [vmem:[#allocation2 + $0xf0] sm:$0xff]
        %v396 = vld [vmem:[#allocation2 + $0xf8] sm:$0xff]
        %v397 = vld [vmem:[#allocation2 + $0x100] sm:$0xff]
        %v398 = vld [vmem:[#allocation2 + $0x108] sm:$0xff]
        %v399 = vld [vmem:[#allocation2 + $0x110] sm:$0xff]
        %v400 = vld [vmem:[#allocation2 + $0x118] sm:$0xff]
        %v401 = vld [vmem:[#allocation2 + $0x120] sm:$0xff]
        %v402 = vld [vmem:[#allocation2 + $0x128] sm:$0xff]
        %v403 = vld [vmem:[#allocation2 + $0x130] sm:$0xff]
        %v404 = vld [vmem:[#allocation2 + $0x138] sm:$0xff]
        %v405 = vld [vmem:[#allocation2 + $0x140] sm:$0xff]
        %v406 = vld [vmem:[#allocation2 + $0x148] sm:$0xff]
        %v407 = vld [vmem:[#allocation2 + $0x150] sm:$0xff]
        %v408 = vld [vmem:[#allocation2 + $0x158] sm:$0xff]
        %v409 = vld [vmem:[#allocation2 + $0x160] sm:$0xff]
        %v410 = vld [vmem:[#allocation2 + $0x168] sm:$0xff]
        %v411 = vld [vmem:[#allocation2 + $0x170] sm:$0xff]
        %v412 = vld [vmem:[#allocation2 + $0x178] sm:$0xff]
        %v413 = vld [vmem:[#allocation2 + $0x180] sm:$0xff]
        %v414 = vld [vmem:[#allocation2 + $0x188] sm:$0xff]
        %v465 = vunpack.c.l.b16 %v365
        %v466 = vunpack.c.h.b16 %v365
        %v467 = vunpack.c.l.b16 %v366
        %v468 = vunpack.c.h.b16 %v366
        %v469 = vunpack.c.l.b16 %v367
        %v470 = vunpack.c.h.b16 %v367
        %v471 = vunpack.c.l.b16 %v368
        %v472 = vunpack.c.h.b16 %v368
        %v473 = vunpack.c.l.b16 %v369
        %v474 = vunpack.c.h.b16 %v369
        %v475 = vunpack.c.l.b16 %v370
        %v476 = vunpack.c.h.b16 %v370
        %v477 = vunpack.c.l.b16 %v371
        %v478 = vunpack.c.h.b16 %v371
        %v479 = vunpack.c.l.b16 %v372
        %v480 = vunpack.c.h.b16 %v372
        %v481 = vunpack.c.l.b16 %v373
        %v482 = vunpack.c.h.b16 %v373
        %v483 = vunpack.c.l.b16 %v374
        %v484 = vunpack.c.h.b16 %v374
        %v485 = vunpack.c.l.b16 %v375
        %v486 = vunpack.c.h.b16 %v375
        %v487 = vunpack.c.l.b16 %v376
        %v488 = vunpack.c.h.b16 %v376
        %v489 = vunpack.c.l.b16 %v377
        %v490 = vunpack.c.h.b16 %v377
        %v491 = vunpack.c.l.b16 %v378
        %v492 = vunpack.c.h.b16 %v378
        %v493 = vunpack.c.l.b16 %v379
        %v494 = vunpack.c.h.b16 %v379
        %v495 = vunpack.c.l.b16 %v380
        %v496 = vunpack.c.h.b16 %v380
        %v497 = vunpack.c.l.b16 %v381
        %v498 = vunpack.c.h.b16 %v381
        %v499 = vunpack.c.l.b16 %v382
        %v500 = vunpack.c.h.b16 %v382
        %v501 = vunpack.c.l.b16 %v383
        %v502 = vunpack.c.h.b16 %v383
        %v503 = vunpack.c.l.b16 %v384
        %v504 = vunpack.c.h.b16 %v384
        %v505 = vunpack.c.l.b16 %v385
        %v506 = vunpack.c.h.b16 %v385
        %v507 = vunpack.c.l.b16 %v386
        %v508 = vunpack.c.h.b16 %v386
        %v509 = vunpack.c.l.b16 %v387
        %v510 = vunpack.c.h.b16 %v387
        %v511 = vunpack.c.l.b16 %v388
        %v512 = vunpack.c.h.b16 %v388
        %v513 = vunpack.c.l.b16 %v389
        %v514 = vunpack.c.h.b16 %v389
        %v515 = vunpack.c.l.b16 %v390
        %v516 = vunpack.c.h.b16 %v390
        %v517 = vunpack.c.l.b16 %v391
        %v518 = vunpack.c.h.b16 %v391
        %v519 = vunpack.c.l.b16 %v392
        %v520 = vunpack.c.h.b16 %v392
        %v521 = vunpack.c.l.b16 %v393
        %v522 = vunpack.c.h.b16 %v393
        %v523 = vunpack.c.l.b16 %v394
        %v524 = vunpack.c.h.b16 %v394
        %v525 = vunpack.c.l.b16 %v395
        %v526 = vunpack.c.h.b16 %v395
        %v527 = vunpack.c.l.b16 %v396
        %v528 = vunpack.c.h.b16 %v396
        %v529 = vunpack.c.l.b16 %v397
        %v530 = vunpack.c.h.b16 %v397
        %v531 = vunpack.c.l.b16 %v398
        %v532 = vunpack.c.h.b16 %v398
        %v533 = vunpack.c.l.b16 %v399
        %v534 = vunpack.c.h.b16 %v399
        %v535 = vunpack.c.l.b16 %v400
        %v536 = vunpack.c.h.b16 %v400
        %v537 = vunpack.c.l.b16 %v401
        %v538 = vunpack.c.h.b16 %v401
        %v539 = vunpack.c.l.b16 %v402
        %v540 = vunpack.c.h.b16 %v402
        %v541 = vunpack.c.l.b16 %v403
        %v542 = vunpack.c.h.b16 %v403
        %v543 = vunpack.c.l.b16 %v404
        %v544 = vunpack.c.h.b16 %v404
        %v545 = vunpack.c.l.b16 %v405
        %v546 = vunpack.c.h.b16 %v405
        %v547 = vunpack.c.l.b16 %v406
        %v548 = vunpack.c.h.b16 %v406
        %v549 = vunpack.c.l.b16 %v407
        %v550 = vunpack.c.h.b16 %v407
        %v551 = vunpack.c.l.b16 %v408
        %v552 = vunpack.c.h.b16 %v408
        %v553 = vunpack.c.l.b16 %v409
        %v554 = vunpack.c.h.b16 %v409
        %v555 = vunpack.c.l.b16 %v410
        %v556 = vunpack.c.h.b16 %v410
        %v557 = vunpack.c.l.b16 %v411
        %v558 = vunpack.c.h.b16 %v411
        %v559 = vunpack.c.l.b16 %v412
        %v560 = vunpack.c.h.b16 %v412
        %v561 = vunpack.c.l.b16 %v413
        %v562 = vunpack.c.h.b16 %v413
        %v563 = vunpack.c.l.b16 %v414
        %v564 = vunpack.c.h.b16 %v414
        %v565 = vpack.c.b16 %v469, %v465
        %v566 = vpack.c.b16 %v470, %v466
        %v567 = vpack.c.b16 %v471, %v467
        %v568 = vpack.c.b16 %v472, %v468
        %v569 = vpack.c.b16 %v477, %v473
        %v570 = vpack.c.b16 %v478, %v474
        %v571 = vpack.c.b16 %v479, %v475
        %v572 = vpack.c.b16 %v480, %v476
        %v573 = vpack.c.b16 %v485, %v481
        %v574 = vpack.c.b16 %v486, %v482
        %v575 = vpack.c.b16 %v487, %v483
        %v576 = vpack.c.b16 %v488, %v484
        %v577 = vpack.c.b16 %v493, %v489
        %v578 = vpack.c.b16 %v494, %v490
        %v579 = vpack.c.b16 %v495, %v491
        %v580 = vpack.c.b16 %v496, %v492
        %v581 = vpack.c.b16 %v501, %v497
        %v582 = vpack.c.b16 %v502, %v498
        %v583 = vpack.c.b16 %v503, %v499
        %v584 = vpack.c.b16 %v504, %v500
        %v585 = vpack.c.b16 %v509, %v505
        %v586 = vpack.c.b16 %v510, %v506
        %v587 = vpack.c.b16 %v511, %v507
        %v588 = vpack.c.b16 %v512, %v508
        %v589 = vpack.c.b16 %v517, %v513
        %v590 = vpack.c.b16 %v518, %v514
        %v591 = vpack.c.b16 %v519, %v515
        %v592 = vpack.c.b16 %v520, %v516
        %v593 = vpack.c.b16 %v525, %v521
        %v594 = vpack.c.b16 %v526, %v522
        %v595 = vpack.c.b16 %v527, %v523
        %v596 = vpack.c.b16 %v528, %v524
        %v597 = vpack.c.b16 %v533, %v529
        %v598 = vpack.c.b16 %v534, %v530
        %v599 = vpack.c.b16 %v535, %v531
        %v600 = vpack.c.b16 %v536, %v532
        %v601 = vpack.c.b16 %v541, %v537
        %v602 = vpack.c.b16 %v542, %v538
        %v603 = vpack.c.b16 %v543, %v539
        %v604 = vpack.c.b16 %v544, %v540
        %v605 = vpack.c.b16 %v549, %v545
        %v606 = vpack.c.b16 %v550, %v546
        %v607 = vpack.c.b16 %v551, %v547
        %v608 = vpack.c.b16 %v552, %v548
        %v609 = vpack.c.b16 %v557, %v553
        %v610 = vpack.c.b16 %v558, %v554
        %v611 = vpack.c.b16 %v559, %v555
        %v612 = vpack.c.b16 %v560, %v556
        %v613 = vpack.c.b16 %v561, %v561
        %v614 = vpack.c.b16 %v562, %v562
        %v615 = vpack.c.b16 %v563, %v563
        %v616 = vpack.c.b16 %v564, %v564
        %vm665 = vcmask 588800
        %v667 = vsel %vm665, %v362, 0
        %v670 = vsel %vm665, %v364, 0
        %vm672 = vcmask 1043456
        %v674 = vsel %vm672, %v613, 0
        %v677 = vsel %vm672, %v614, 0
        %v680 = vsel %vm672, %v615, 0
        %v683 = vsel %vm672, %v616, 0
        %685 = vmatprep.subr.bf16.mxu0 %v594
        %686 = vmatpush1.bf16.msra.mxu0 %v593
        %687 = vmatprep.subr.bf16.mxu0 %v590
        %688 = vmatpush1.bf16.msra.mxu0 %v589
        %689 = vmatprep.subr.bf16.mxu0 %v586
        %690 = vmatpush1.bf16.msra.mxu0 %v585
        %691 = vmatprep.subr.bf16.mxu0 %v582
        %692 = vmatpush1.bf16.msra.mxu0 %v581
        %693 = vmatprep.subr.bf16.mxu0 %v578
        %694 = vmatpush1.bf16.msra.mxu0 %v577
        %695 = vmatprep.subr.bf16.mxu0 %v574
        %696 = vmatpush1.bf16.msra.mxu0 %v573
        %697 = vmatprep.subr.bf16.mxu0 %v570
        %698 = vmatpush1.bf16.msra.mxu0 %v569
        %699 = vmatprep.subr.bf16.mxu0 %v566
        %700 = vmatpush1.bf16.msra.mxu0 %v565
        %701 = vmatprep.subr.bf16.mxu0 0
        %702 = vmatpush2.bf16.msra.mxu0 0
        %703 = vmatprep.subr.bf16.mxu0 0
        %704 = vmatpush2.bf16.msra.mxu0 0
        %705 = vmatprep.subr.bf16.mxu0 0
        %706 = vmatpush2.bf16.msra.mxu0 0
        %707 = vmatprep.subr.bf16.mxu0 %v677
        %708 = vmatpush2.bf16.msra.mxu0 %v674
        %709 = vmatprep.subr.bf16.mxu0 %v610
        %710 = vmatpush2.bf16.msra.mxu0 %v609
        %711 = vmatprep.subr.bf16.mxu0 %v606
        %712 = vmatpush2.bf16.msra.mxu0 %v605
        %713 = vmatprep.subr.bf16.mxu0 %v602
        %714 = vmatpush2.bf16.msra.mxu0 %v601
        %715 = vmatprep.subr.bf16.mxu0 %v598
        %716 = vmatpush2.bf16.msra.mxu0 %v597
        %717 = vmatprep.mubr.bf16.mxu0 %v667
        %718 = vmatmul.mubr.bf16.gmra.mxu0 %v361
        %v719 = vpop.f32.mrf.mxu0
        %v720 = vadd.f32 0.0, %v719
        %v721 = vpop.f32.mrf.mxu0
        %v722 = vadd.f32 0.0, %v721
        %v723 = vpop.f32.mrf.mxu0
        %v724 = vadd.f32 0.0, %v723
        %v725 = vpop.f32.mrf.mxu0
        %v726 = vadd.f32 0.0, %v725
        %727 = vmatprep.mubr.bf16.mxu0 %v670
        %728 = vmatmul.mubr.bf16.gmra.mxu0 %v363
        %v729 = vpop.f32.mrf.mxu0
        %v730 = vadd.f32 0.0, %v729
        %v731 = vpop.f32.mrf.mxu0
        %v732 = vadd.f32 0.0, %v731
        %v733 = vpop.f32.mrf.mxu0
        %v734 = vadd.f32 0.0, %v733
        %v735 = vpop.f32.mrf.mxu0
        %v736 = vadd.f32 0.0, %v735
        %737 = vdwg.mxu0
        %738 = vmatprep.subr.bf16.mxu0 %v596
        %739 = vmatpush1.bf16.msra.mxu0 %v595
        %740 = vmatprep.subr.bf16.mxu0 %v592
        %741 = vmatpush1.bf16.msra.mxu0 %v591
        %742 = vmatprep.subr.bf16.mxu0 %v588
        %743 = vmatpush1.bf16.msra.mxu0 %v587
        %744 = vmatprep.subr.bf16.mxu0 %v584
        %745 = vmatpush1.bf16.msra.mxu0 %v583
        %746 = vmatprep.subr.bf16.mxu0 %v580
        %747 = vmatpush1.bf16.msra.mxu0 %v579
        %748 = vmatprep.subr.bf16.mxu0 %v576
        %749 = vmatpush1.bf16.msra.mxu0 %v575
        %750 = vmatprep.subr.bf16.mxu0 %v572
        %751 = vmatpush1.bf16.msra.mxu0 %v571
        %752 = vmatprep.subr.bf16.mxu0 %v568
        %753 = vmatpush1.bf16.msra.mxu0 %v567
        %754 = vmatprep.subr.bf16.mxu0 0
        %755 = vmatpush2.bf16.msra.mxu0 0
        %756 = vmatprep.subr.bf16.mxu0 0
        %757 = vmatpush2.bf16.msra.mxu0 0
        %758 = vmatprep.subr.bf16.mxu0 0
        %759 = vmatpush2.bf16.msra.mxu0 0
        %760 = vmatprep.subr.bf16.mxu0 %v683
        %761 = vmatpush2.bf16.msra.mxu0 %v680
        %762 = vmatprep.subr.bf16.mxu0 %v612
        %763 = vmatpush2.bf16.msra.mxu0 %v611
        %764 = vmatprep.subr.bf16.mxu0 %v608
        %765 = vmatpush2.bf16.msra.mxu0 %v607
        %766 = vmatprep.subr.bf16.mxu0 %v604
        %767 = vmatpush2.bf16.msra.mxu0 %v603
        %768 = vmatprep.subr.bf16.mxu0 %v600
        %769 = vmatpush2.bf16.msra.mxu0 %v599
        %770 = vmatprep.mubr.bf16.mxu0 %v667
        %771 = vmatmul.mubr.bf16.gmra.mxu0 %v361
        %v772 = vpop.f32.mrf.mxu0
        %v773 = vadd.f32 0.0, %v772
        %v774 = vpop.f32.mrf.mxu0
        %v775 = vadd.f32 0.0, %v774
        %v776 = vpop.f32.mrf.mxu0
        %v777 = vadd.f32 0.0, %v776
        %v778 = vpop.f32.mrf.mxu0
        %v779 = vadd.f32 0.0, %v778
        %780 = vmatprep.mubr.bf16.mxu0 %v670
        %781 = vmatmul.mubr.bf16.gmra.mxu0 %v363
        %v782 = vpop.f32.mrf.mxu0
        %v783 = vadd.f32 0.0, %v782
        %v784 = vpop.f32.mrf.mxu0
        %v785 = vadd.f32 0.0, %v784
        %v786 = vpop.f32.mrf.mxu0
        %v787 = vadd.f32 0.0, %v786
        %v788 = vpop.f32.mrf.mxu0
        %v789 = vadd.f32 0.0, %v788
        %790 = vdwg.mxu0
        %v791 = vpack.c.bf16 %v724, %v720
        %v792 = vpack.c.bf16 %v726, %v722
        %v793 = vpack.c.bf16 %v777, %v773
        %v794 = vpack.c.bf16 %v779, %v775
        %v795 = vpack.c.bf16 %v734, %v730
        %v796 = vpack.c.bf16 %v736, %v732
        %v797 = vpack.c.bf16 %v787, %v783
        %v798 = vpack.c.bf16 %v789, %v785
        %v799 = vld [vmem:[%s2] sm:$0xff]
        %v800 = vld [vmem:[%s2 + $0x8] sm:$0xff]
        %v801 = vld [vmem:[%s2 + $0x10] sm:$0xff]
        %v802 = vld [vmem:[%s2 + $0x18] sm:$0xff]
        %v803 = vld [vmem:[%s2 + $0x20] sm:$0xff]
        %v804 = vld [vmem:[%s2 + $0x28] sm:$0xff]
        %v805 = vld [vmem:[%s2 + $0x30] sm:$0xff]
        %v806 = vld [vmem:[%s2 + $0x38] sm:$0xff]
        %v807 = vld [vmem:[%s2 + $0x40] sm:$0xff]
        %v808 = vld [vmem:[%s2 + $0x48] sm:$0xff]
        %v809 = vld [vmem:[%s2 + $0x50] sm:$0xff]
        %v810 = vld [vmem:[%s2 + $0x58] sm:$0xff]
        %v811 = vld [vmem:[%s2 + $0x60] sm:$0xff]
        %v812 = vld [vmem:[%s2 + $0x68] sm:$0xff]
        %v813 = vld [vmem:[%s2 + $0x70] sm:$0xff]
        %v814 = vld [vmem:[%s2 + $0x78] sm:$0xff]
        %v815 = vld [vmem:[%s2 + $0x80] sm:$0xff]
        %v816 = vld [vmem:[%s2 + $0x88] sm:$0xff]
        %v817 = vld [vmem:[%s2 + $0x90] sm:$0xff]
        %v818 = vld [vmem:[%s2 + $0x98] sm:$0xff]
        %v819 = vld [vmem:[%s2 + $0xa0] sm:$0xff]
        %v820 = vld [vmem:[%s2 + $0xa8] sm:$0xff]
        %v821 = vld [vmem:[%s2 + $0xb0] sm:$0xff]
        %v822 = vld [vmem:[%s2 + $0xb8] sm:$0xff]
        %v823 = vld [vmem:[%s2 + $0xc0] sm:$0xff]
        %v824 = vld [vmem:[%s2 + $0xc8] sm:$0xff]
        %v825 = vld [vmem:[%s2 + $0xd0] sm:$0xff]
        %v826 = vld [vmem:[%s2 + $0xd8] sm:$0xff]
        %v827 = vld [vmem:[%s2 + $0xe0] sm:$0xff]
        %v828 = vld [vmem:[%s2 + $0xe8] sm:$0xff]
        %v829 = vld [vmem:[%s2 + $0xf0] sm:$0xff]
        %v830 = vld [vmem:[%s2 + $0xf8] sm:$0xff]
        %v831 = vld [vmem:[%s2 + $0x100] sm:$0xff]
        %v832 = vld [vmem:[%s2 + $0x108] sm:$0xff]
        %v833 = vld [vmem:[%s2 + $0x110] sm:$0xff]
        %v834 = vld [vmem:[%s2 + $0x118] sm:$0xff]
        %v835 = vld [vmem:[%s2 + $0x120] sm:$0xff]
        %v836 = vld [vmem:[%s2 + $0x128] sm:$0xff]
        %v837 = vld [vmem:[%s2 + $0x130] sm:$0xff]
        %v838 = vld [vmem:[%s2 + $0x138] sm:$0xff]
        %v839 = vld [vmem:[%s2 + $0x140] sm:$0xff]
        %v840 = vld [vmem:[%s2 + $0x148] sm:$0xff]
        %v841 = vld [vmem:[%s2 + $0x150] sm:$0xff]
        %v842 = vld [vmem:[%s2 + $0x158] sm:$0xff]
        %v843 = vld [vmem:[%s2 + $0x160] sm:$0xff]
        %v844 = vld [vmem:[%s2 + $0x168] sm:$0xff]
        %v845 = vld [vmem:[%s2 + $0x170] sm:$0xff]
        %v846 = vld [vmem:[%s2 + $0x178] sm:$0xff]
        %v847 = vld [vmem:[%s2 + $0x180] sm:$0xff]
        %v848 = vld [vmem:[%s2 + $0x188] sm:$0xff]
        %v849 = vld [vmem:[%s2 + $0x190] sm:$0xff]
        %v850 = vld [vmem:[%s2 + $0x198] sm:$0xff]
        %v851 = vld [vmem:[%s2 + $0x1a0] sm:$0xff]
        %v852 = vld [vmem:[%s2 + $0x1a8] sm:$0xff]
        %v853 = vld [vmem:[%s2 + $0x1b0] sm:$0xff]
        %v854 = vld [vmem:[%s2 + $0x1b8] sm:$0xff]
        %v855 = vld [vmem:[%s2 + $0x1c0] sm:$0xff]
        %v856 = vld [vmem:[%s2 + $0x1c8] sm:$0xff]
        %v857 = vld [vmem:[%s2 + $0x1d0] sm:$0xff]
        %v858 = vld [vmem:[%s2 + $0x1d8] sm:$0xff]
        %v859 = vld [vmem:[%s2 + $0x1e0] sm:$0xff]
        %v860 = vld [vmem:[%s2 + $0x1e8] sm:$0xff]
        %v861 = vld [vmem:[%s2 + $0x1f0] sm:$0xff]
        %v862 = vld [vmem:[%s2 + $0x1f8] sm:$0xff]
        %v927 = vunpack.c.l.b16 %v799
        %v928 = vunpack.c.h.b16 %v799
        %v929 = vunpack.c.l.b16 %v800
        %v930 = vunpack.c.h.b16 %v800
        %v931 = vunpack.c.l.b16 %v801
        %v932 = vunpack.c.h.b16 %v801
        %v933 = vunpack.c.l.b16 %v802
        %v934 = vunpack.c.h.b16 %v802
        %v935 = vunpack.c.l.b16 %v803
        %v936 = vunpack.c.h.b16 %v803
        %v937 = vunpack.c.l.b16 %v804
        %v938 = vunpack.c.h.b16 %v804
        %v939 = vunpack.c.l.b16 %v805
        %v940 = vunpack.c.h.b16 %v805
        %v941 = vunpack.c.l.b16 %v806
        %v942 = vunpack.c.h.b16 %v806
        %v943 = vunpack.c.l.b16 %v807
        %v944 = vunpack.c.h.b16 %v807
        %v945 = vunpack.c.l.b16 %v808
        %v946 = vunpack.c.h.b16 %v808
        %v947 = vunpack.c.l.b16 %v809
        %v948 = vunpack.c.h.b16 %v809
        %v949 = vunpack.c.l.b16 %v810
        %v950 = vunpack.c.h.b16 %v810
        %v951 = vunpack.c.l.b16 %v811
        %v952 = vunpack.c.h.b16 %v811
        %v953 = vunpack.c.l.b16 %v812
        %v954 = vunpack.c.h.b16 %v812
        %v955 = vunpack.c.l.b16 %v813
        %v956 = vunpack.c.h.b16 %v813
        %v957 = vunpack.c.l.b16 %v814
        %v958 = vunpack.c.h.b16 %v814
        %v959 = vunpack.c.l.b16 %v815
        %v960 = vunpack.c.h.b16 %v815
        %v961 = vunpack.c.l.b16 %v816
        %v962 = vunpack.c.h.b16 %v816
        %v963 = vunpack.c.l.b16 %v817
        %v964 = vunpack.c.h.b16 %v817
        %v965 = vunpack.c.l.b16 %v818
        %v966 = vunpack.c.h.b16 %v818
        %v967 = vunpack.c.l.b16 %v819
        %v968 = vunpack.c.h.b16 %v819
        %v969 = vunpack.c.l.b16 %v820
        %v970 = vunpack.c.h.b16 %v820
        %v971 = vunpack.c.l.b16 %v821
        %v972 = vunpack.c.h.b16 %v821
        %v973 = vunpack.c.l.b16 %v822
        %v974 = vunpack.c.h.b16 %v822
        %v975 = vunpack.c.l.b16 %v823
        %v976 = vunpack.c.h.b16 %v823
        %v977 = vunpack.c.l.b16 %v824
        %v978 = vunpack.c.h.b16 %v824
        %v979 = vunpack.c.l.b16 %v825
        %v980 = vunpack.c.h.b16 %v825
        %v981 = vunpack.c.l.b16 %v826
        %v982 = vunpack.c.h.b16 %v826
        %v983 = vunpack.c.l.b16 %v827
        %v984 = vunpack.c.h.b16 %v827
        %v985 = vunpack.c.l.b16 %v828
        %v986 = vunpack.c.h.b16 %v828
        %v987 = vunpack.c.l.b16 %v829
        %v988 = vunpack.c.h.b16 %v829
        %v989 = vunpack.c.l.b16 %v830
        %v990 = vunpack.c.h.b16 %v830
        %v991 = vunpack.c.l.b16 %v831
        %v992 = vunpack.c.h.b16 %v831
        %v993 = vunpack.c.l.b16 %v832
        %v994 = vunpack.c.h.b16 %v832
        %v995 = vunpack.c.l.b16 %v833
        %v996 = vunpack.c.h.b16 %v833
        %v997 = vunpack.c.l.b16 %v834
        %v998 = vunpack.c.h.b16 %v834
        %v999 = vunpack.c.l.b16 %v835
        %v1000 = vunpack.c.h.b16 %v835
        %v1001 = vunpack.c.l.b16 %v836
        %v1002 = vunpack.c.h.b16 %v836
        %v1003 = vunpack.c.l.b16 %v837
        %v1004 = vunpack.c.h.b16 %v837
        %v1005 = vunpack.c.l.b16 %v838
        %v1006 = vunpack.c.h.b16 %v838
        %v1007 = vunpack.c.l.b16 %v839
        %v1008 = vunpack.c.h.b16 %v839
        %v1009 = vunpack.c.l.b16 %v840
        %v1010 = vunpack.c.h.b16 %v840
        %v1011 = vunpack.c.l.b16 %v841
        %v1012 = vunpack.c.h.b16 %v841
        %v1013 = vunpack.c.l.b16 %v842
        %v1014 = vunpack.c.h.b16 %v842
        %v1015 = vunpack.c.l.b16 %v843
        %v1016 = vunpack.c.h.b16 %v843
        %v1017 = vunpack.c.l.b16 %v844
        %v1018 = vunpack.c.h.b16 %v844
        %v1019 = vunpack.c.l.b16 %v845
        %v1020 = vunpack.c.h.b16 %v845
        %v1021 = vunpack.c.l.b16 %v846
        %v1022 = vunpack.c.h.b16 %v846
        %v1023 = vunpack.c.l.b16 %v847
        %v1024 = vunpack.c.h.b16 %v847
        %v1025 = vunpack.c.l.b16 %v848
        %v1026 = vunpack.c.h.b16 %v848
        %v1027 = vunpack.c.l.b16 %v849
        %v1028 = vunpack.c.h.b16 %v849
        %v1029 = vunpack.c.l.b16 %v850
        %v1030 = vunpack.c.h.b16 %v850
        %v1031 = vunpack.c.l.b16 %v851
        %v1032 = vunpack.c.h.b16 %v851
        %v1033 = vunpack.c.l.b16 %v852
        %v1034 = vunpack.c.h.b16 %v852
        %v1035 = vunpack.c.l.b16 %v853
        %v1036 = vunpack.c.h.b16 %v853
        %v1037 = vunpack.c.l.b16 %v854
        %v1038 = vunpack.c.h.b16 %v854
        %v1039 = vunpack.c.l.b16 %v855
        %v1040 = vunpack.c.h.b16 %v855
        %v1041 = vunpack.c.l.b16 %v856
        %v1042 = vunpack.c.h.b16 %v856
        %v1043 = vunpack.c.l.b16 %v857
        %v1044 = vunpack.c.h.b16 %v857
        %v1045 = vunpack.c.l.b16 %v858
        %v1046 = vunpack.c.h.b16 %v858
        %v1047 = vunpack.c.l.b16 %v859
        %v1048 = vunpack.c.h.b16 %v859
        %v1049 = vunpack.c.l.b16 %v860
        %v1050 = vunpack.c.h.b16 %v860
        %v1051 = vunpack.c.l.b16 %v861
        %v1052 = vunpack.c.h.b16 %v861
        %v1053 = vunpack.c.l.b16 %v862
        %v1054 = vunpack.c.h.b16 %v862
        %v1055 = vpack.c.b16 %v929, %v927
        %v1056 = vpack.c.b16 %v930, %v928
        %v1057 = vpack.c.b16 %v933, %v931
        %v1058 = vpack.c.b16 %v934, %v932
        %v1059 = vpack.c.b16 %v937, %v935
        %v1060 = vpack.c.b16 %v938, %v936
        %v1061 = vpack.c.b16 %v941, %v939
        %v1062 = vpack.c.b16 %v942, %v940
        %v1063 = vpack.c.b16 %v945, %v943
        %v1064 = vpack.c.b16 %v946, %v944
        %v1065 = vpack.c.b16 %v949, %v947
        %v1066 = vpack.c.b16 %v950, %v948
        %v1067 = vpack.c.b16 %v953, %v951
        %v1068 = vpack.c.b16 %v954, %v952
        %v1069 = vpack.c.b16 %v957, %v955
        %v1070 = vpack.c.b16 %v958, %v956
        %v1071 = vpack.c.b16 %v961, %v959
        %v1072 = vpack.c.b16 %v962, %v960
        %v1073 = vpack.c.b16 %v965, %v963
        %v1074 = vpack.c.b16 %v966, %v964
        %v1075 = vpack.c.b16 %v969, %v967
        %v1076 = vpack.c.b16 %v970, %v968
        %v1077 = vpack.c.b16 %v973, %v971
        %v1078 = vpack.c.b16 %v974, %v972
        %v1079 = vpack.c.b16 %v977, %v975
        %v1080 = vpack.c.b16 %v978, %v976
        %v1081 = vpack.c.b16 %v981, %v979
        %v1082 = vpack.c.b16 %v982, %v980
        %v1083 = vpack.c.b16 %v985, %v983
        %v1084 = vpack.c.b16 %v986, %v984
        %v1085 = vpack.c.b16 %v989, %v987
        %v1086 = vpack.c.b16 %v990, %v988
        %v1087 = vpack.c.b16 %v993, %v991
        %v1088 = vpack.c.b16 %v994, %v992
        %v1089 = vpack.c.b16 %v997, %v995
        %v1090 = vpack.c.b16 %v998, %v996
        %v1091 = vpack.c.b16 %v1001, %v999
        %v1092 = vpack.c.b16 %v1002, %v1000
        %v1093 = vpack.c.b16 %v1005, %v1003
        %v1094 = vpack.c.b16 %v1006, %v1004
        %v1095 = vpack.c.b16 %v1009, %v1007
        %v1096 = vpack.c.b16 %v1010, %v1008
        %v1097 = vpack.c.b16 %v1013, %v1011
        %v1098 = vpack.c.b16 %v1014, %v1012
        %v1099 = vpack.c.b16 %v1017, %v1015
        %v1100 = vpack.c.b16 %v1018, %v1016
        %v1101 = vpack.c.b16 %v1021, %v1019
        %v1102 = vpack.c.b16 %v1022, %v1020
        %v1103 = vpack.c.b16 %v1025, %v1023
        %v1104 = vpack.c.b16 %v1026, %v1024
        %v1105 = vpack.c.b16 %v1029, %v1027
        %v1106 = vpack.c.b16 %v1030, %v1028
        %v1107 = vpack.c.b16 %v1033, %v1031
        %v1108 = vpack.c.b16 %v1034, %v1032
        %v1109 = vpack.c.b16 %v1037, %v1035
        %v1110 = vpack.c.b16 %v1038, %v1036
        %v1111 = vpack.c.b16 %v1041, %v1039
        %v1112 = vpack.c.b16 %v1042, %v1040
        %v1113 = vpack.c.b16 %v1045, %v1043
        %v1114 = vpack.c.b16 %v1046, %v1044
        %v1115 = vpack.c.b16 %v1049, %v1047
        %v1116 = vpack.c.b16 %v1050, %v1048
        %v1117 = vpack.c.b16 %v1053, %v1051
        %v1118 = vpack.c.b16 %v1054, %v1052
        %1183 = vmatprep.subr.bf16.mxu0 %v1070
        %1184 = vmatpush1.bf16.msra.mxu0 %v1069
        %1185 = vmatprep.subr.bf16.mxu0 %v1068
        %1186 = vmatpush1.bf16.msra.mxu0 %v1067
        %1187 = vmatprep.subr.bf16.mxu0 %v1066
        %1188 = vmatpush1.bf16.msra.mxu0 %v1065
        %1189 = vmatprep.subr.bf16.mxu0 %v1064
        %1190 = vmatpush1.bf16.msra.mxu0 %v1063
        %1191 = vmatprep.subr.bf16.mxu0 %v1062
        %1192 = vmatpush1.bf16.msra.mxu0 %v1061
        %1193 = vmatprep.subr.bf16.mxu0 %v1060
        %1194 = vmatpush1.bf16.msra.mxu0 %v1059
        %1195 = vmatprep.subr.bf16.mxu0 %v1058
        %1196 = vmatpush1.bf16.msra.mxu0 %v1057
        %1197 = vmatprep.subr.bf16.mxu0 %v1056
        %1198 = vmatpush1.bf16.msra.mxu0 %v1055
        %1199 = vmatprep.subr.bf16.mxu0 %v1086
        %1200 = vmatpush2.bf16.msra.mxu0 %v1085
        %1201 = vmatprep.subr.bf16.mxu0 %v1084
        %1202 = vmatpush2.bf16.msra.mxu0 %v1083
        %1203 = vmatprep.subr.bf16.mxu0 %v1082
        %1204 = vmatpush2.bf16.msra.mxu0 %v1081
        %1205 = vmatprep.subr.bf16.mxu0 %v1080
        %1206 = vmatpush2.bf16.msra.mxu0 %v1079
        %1207 = vmatprep.subr.bf16.mxu0 %v1078
        %1208 = vmatpush2.bf16.msra.mxu0 %v1077
        %1209 = vmatprep.subr.bf16.mxu0 %v1076
        %1210 = vmatpush2.bf16.msra.mxu0 %v1075
        %1211 = vmatprep.subr.bf16.mxu0 %v1074
        %1212 = vmatpush2.bf16.msra.mxu0 %v1073
        %1213 = vmatprep.subr.bf16.mxu0 %v1072
        %1214 = vmatpush2.bf16.msra.mxu0 %v1071
        %1215 = vmatprep.mubr.bf16.mxu0 %v792
        %1216 = vmatmul.mubr.bf16.gmra.mxu0 %v791
        %v1217 = vpop.f32.mrf.mxu0
        %v1218 = vadd.f32 0.0, %v1217
        %v1219 = vpop.f32.mrf.mxu0
        %v1220 = vadd.f32 0.0, %v1219
        %v1221 = vpop.f32.mrf.mxu0
        %v1222 = vadd.f32 0.0, %v1221
        %v1223 = vpop.f32.mrf.mxu0
        %v1224 = vadd.f32 0.0, %v1223
        %1225 = vmatprep.mubr.bf16.mxu0 %v796
        %1226 = vmatmul.mubr.bf16.gmra.mxu0 %v795
        %v1227 = vpop.f32.mrf.mxu0
        %v1228 = vadd.f32 0.0, %v1227
        %v1229 = vpop.f32.mrf.mxu0
        %v1230 = vadd.f32 0.0, %v1229
        %v1231 = vpop.f32.mrf.mxu0
        %v1232 = vadd.f32 0.0, %v1231
        %v1233 = vpop.f32.mrf.mxu0
        %v1234 = vadd.f32 0.0, %v1233
        %1235 = vdwg.mxu0
        %1236 = vmatprep.subr.bf16.mxu0 %v1102
        %1237 = vmatpush1.bf16.msra.mxu0 %v1101
        %1238 = vmatprep.subr.bf16.mxu0 %v1100
        %1239 = vmatpush1.bf16.msra.mxu0 %v1099
        %1240 = vmatprep.subr.bf16.mxu0 %v1098
        %1241 = vmatpush1.bf16.msra.mxu0 %v1097
        %1242 = vmatprep.subr.bf16.mxu0 %v1096
        %1243 = vmatpush1.bf16.msra.mxu0 %v1095
        %1244 = vmatprep.subr.bf16.mxu0 %v1094
        %1245 = vmatpush1.bf16.msra.mxu0 %v1093
        %1246 = vmatprep.subr.bf16.mxu0 %v1092
        %1247 = vmatpush1.bf16.msra.mxu0 %v1091
        %1248 = vmatprep.subr.bf16.mxu0 %v1090
        %1249 = vmatpush1.bf16.msra.mxu0 %v1089
        %1250 = vmatprep.subr.bf16.mxu0 %v1088
        %1251 = vmatpush1.bf16.msra.mxu0 %v1087
        %1252 = vmatprep.subr.bf16.mxu0 %v1118
        %1253 = vmatpush2.bf16.msra.mxu0 %v1117
        %1254 = vmatprep.subr.bf16.mxu0 %v1116
        %1255 = vmatpush2.bf16.msra.mxu0 %v1115
        %1256 = vmatprep.subr.bf16.mxu0 %v1114
        %1257 = vmatpush2.bf16.msra.mxu0 %v1113
        %1258 = vmatprep.subr.bf16.mxu0 %v1112
        %1259 = vmatpush2.bf16.msra.mxu0 %v1111
        %1260 = vmatprep.subr.bf16.mxu0 %v1110
        %1261 = vmatpush2.bf16.msra.mxu0 %v1109
        %1262 = vmatprep.subr.bf16.mxu0 %v1108
        %1263 = vmatpush2.bf16.msra.mxu0 %v1107
        %1264 = vmatprep.subr.bf16.mxu0 %v1106
        %1265 = vmatpush2.bf16.msra.mxu0 %v1105
        %1266 = vmatprep.subr.bf16.mxu0 %v1104
        %1267 = vmatpush2.bf16.msra.mxu0 %v1103
        %1268 = vmatprep.mubr.bf16.mxu0 %v794
        %1269 = vmatmul.mubr.bf16.gmra.mxu0 %v793
        %v1270 = vpop.f32.mrf.mxu0
        %v1271 = vadd.f32 %v1218, %v1270
        %v1272 = vpop.f32.mrf.mxu0
        %v1273 = vadd.f32 %v1220, %v1272
        %v1274 = vpop.f32.mrf.mxu0
        %v1275 = vadd.f32 %v1222, %v1274
        %v1276 = vpop.f32.mrf.mxu0
        %v1277 = vadd.f32 %v1224, %v1276
        %1278 = vmatprep.mubr.bf16.mxu0 %v798
        %1279 = vmatmul.mubr.bf16.gmra.mxu0 %v797
        %v1280 = vpop.f32.mrf.mxu0
        %v1281 = vadd.f32 %v1228, %v1280
        %v1282 = vpop.f32.mrf.mxu0
        %v1283 = vadd.f32 %v1230, %v1282
        %v1284 = vpop.f32.mrf.mxu0
        %v1285 = vadd.f32 %v1232, %v1284
        %v1286 = vpop.f32.mrf.mxu0
        %v1287 = vadd.f32 %v1234, %v1286
        %1288 = vdwg.mxu0
        %v1289 = vpack.c.bf16 %v1275, %v1271
        %v1290 = vpack.c.bf16 %v1277, %v1273
        %v1291 = vpack.c.bf16 %v1285, %v1281
        %v1292 = vpack.c.bf16 %v1287, %v1283
        %v1293 = vld [vmem:[%s3] sm:$0xf]
        %v1294 = vld [vmem:[%s3 + $0x4] sm:$0xf]
        %v1295 = vld [vmem:[%s3 + $0x8] sm:$0xf]
        %v1296 = vld [vmem:[%s3 + $0xc] sm:$0xf]
        %v1297 = vld [vmem:[%s3 + $0x10] sm:$0xf]
        %v1298 = vld [vmem:[%s3 + $0x14] sm:$0xf]
        %v1299 = vld [vmem:[%s3 + $0x18] sm:$0xf]
        %v1300 = vld [vmem:[%s3 + $0x1c] sm:$0xf]
        %v1301 = vld [vmem:[%s3 + $0x20] sm:$0xf]
        %v1302 = vld [vmem:[%s3 + $0x24] sm:$0xf]
        %v1303 = vld [vmem:[%s3 + $0x28] sm:$0xf]
        %v1304 = vld [vmem:[%s3 + $0x2c] sm:$0xf]
        %v1305 = vld [vmem:[%s3 + $0x30] sm:$0xf]
        %v1306 = vld [vmem:[%s3 + $0x34] sm:$0xf]
        %v1307 = vld [vmem:[%s3 + $0x38] sm:$0xf]
        %v1308 = vld [vmem:[%s3 + $0x3c] sm:$0xf]
        %v1309 = vld [vmem:[%s3 + $0x40] sm:$0xf]
        %v1310 = vld [vmem:[%s3 + $0x44] sm:$0xf]
        %v1311 = vld [vmem:[%s3 + $0x48] sm:$0xf]
        %v1312 = vld [vmem:[%s3 + $0x4c] sm:$0xf]
        %v1313 = vld [vmem:[%s3 + $0x50] sm:$0xf]
        %v1314 = vld [vmem:[%s3 + $0x54] sm:$0xf]
        %v1315 = vld [vmem:[%s3 + $0x58] sm:$0xf]
        %v1316 = vld [vmem:[%s3 + $0x5c] sm:$0xf]
        %v1317 = vld [vmem:[%s3 + $0x60] sm:$0xf]
        %v1318 = vld [vmem:[%s3 + $0x64] sm:$0xf]
        %v1319 = vld [vmem:[%s3 + $0x68] sm:$0xf]
        %v1320 = vld [vmem:[%s3 + $0x6c] sm:$0xf]
        %v1321 = vld [vmem:[%s3 + $0x70] sm:$0xf]
        %v1322 = vld [vmem:[%s3 + $0x74] sm:$0xf]
        %v1323 = vld [vmem:[%s3 + $0x78] sm:$0xf]
        %v1324 = vld [vmem:[%s3 + $0x7c] sm:$0xf]
        %v1357 = vunpack.c.l.b16 %v1293
        %v1358 = vunpack.c.l.b16 %v1294
        %v1359 = vunpack.c.l.b16 %v1295
        %v1360 = vunpack.c.l.b16 %v1296
        %v1361 = vunpack.c.l.b16 %v1297
        %v1362 = vunpack.c.l.b16 %v1298
        %v1363 = vunpack.c.l.b16 %v1299
        %v1364 = vunpack.c.l.b16 %v1300
        %v1365 = vunpack.c.l.b16 %v1301
        %v1366 = vunpack.c.l.b16 %v1302
        %v1367 = vunpack.c.l.b16 %v1303
        %v1368 = vunpack.c.l.b16 %v1304
        %v1369 = vunpack.c.l.b16 %v1305
        %v1370 = vunpack.c.l.b16 %v1306
        %v1371 = vunpack.c.l.b16 %v1307
        %v1372 = vunpack.c.l.b16 %v1308
        %v1373 = vunpack.c.l.b16 %v1309
        %v1374 = vunpack.c.l.b16 %v1310
        %v1375 = vunpack.c.l.b16 %v1311
        %v1376 = vunpack.c.l.b16 %v1312
        %v1377 = vunpack.c.l.b16 %v1313
        %v1378 = vunpack.c.l.b16 %v1314
        %v1379 = vunpack.c.l.b16 %v1315
        %v1380 = vunpack.c.l.b16 %v1316
        %v1381 = vunpack.c.l.b16 %v1317
        %v1382 = vunpack.c.l.b16 %v1318
        %v1383 = vunpack.c.l.b16 %v1319
        %v1384 = vunpack.c.l.b16 %v1320
        %v1385 = vunpack.c.l.b16 %v1321
        %v1386 = vunpack.c.l.b16 %v1322
        %v1387 = vunpack.c.l.b16 %v1323
        %v1388 = vunpack.c.l.b16 %v1324
        %v1389 = vpack.c.b16 %v1358, %v1357
        %v1390 = vpack.c.b16 %v1360, %v1359
        %v1391 = vpack.c.b16 %v1362, %v1361
        %v1392 = vpack.c.b16 %v1364, %v1363
        %v1393 = vpack.c.b16 %v1366, %v1365
        %v1394 = vpack.c.b16 %v1368, %v1367
        %v1395 = vpack.c.b16 %v1370, %v1369
        %v1396 = vpack.c.b16 %v1372, %v1371
        %v1397 = vpack.c.b16 %v1374, %v1373
        %v1398 = vpack.c.b16 %v1376, %v1375
        %v1399 = vpack.c.b16 %v1378, %v1377
        %v1400 = vpack.c.b16 %v1380, %v1379
        %v1401 = vpack.c.b16 %v1382, %v1381
        %v1402 = vpack.c.b16 %v1384, %v1383
        %v1403 = vpack.c.b16 %v1386, %v1385
        %v1404 = vpack.c.b16 %v1388, %v1387
        %1421 = vmatprep.subr.bf16.mxu0 0
        %1422 = vmatpush1.bf16.msra.mxu0 %v1396
        %1423 = vmatprep.subr.bf16.mxu0 0
        %1424 = vmatpush1.bf16.msra.mxu0 %v1395
        %1425 = vmatprep.subr.bf16.mxu0 0
        %1426 = vmatpush1.bf16.msra.mxu0 %v1394
        %1427 = vmatprep.subr.bf16.mxu0 0
        %1428 = vmatpush1.bf16.msra.mxu0 %v1393
        %1429 = vmatprep.subr.bf16.mxu0 0
        %1430 = vmatpush1.bf16.msra.mxu0 %v1392
        %1431 = vmatprep.subr.bf16.mxu0 0
        %1432 = vmatpush1.bf16.msra.mxu0 %v1391
        %1433 = vmatprep.subr.bf16.mxu0 0
        %1434 = vmatpush1.bf16.msra.mxu0 %v1390
        %1435 = vmatprep.subr.bf16.mxu0 0
        %1436 = vmatpush1.bf16.msra.mxu0 %v1389
        %1437 = vmatprep.subr.bf16.mxu0 0
        %1438 = vmatpush2.bf16.msra.mxu0 %v1404
        %1439 = vmatprep.subr.bf16.mxu0 0
        %1440 = vmatpush2.bf16.msra.mxu0 %v1403
        %1441 = vmatprep.subr.bf16.mxu0 0
        %1442 = vmatpush2.bf16.msra.mxu0 %v1402
        %1443 = vmatprep.subr.bf16.mxu0 0
        %1444 = vmatpush2.bf16.msra.mxu0 %v1401
        %1445 = vmatprep.subr.bf16.mxu0 0
        %1446 = vmatpush2.bf16.msra.mxu0 %v1400
        %1447 = vmatprep.subr.bf16.mxu0 0
        %1448 = vmatpush2.bf16.msra.mxu0 %v1399
        %1449 = vmatprep.subr.bf16.mxu0 0
        %1450 = vmatpush2.bf16.msra.mxu0 %v1398
        %1451 = vmatprep.subr.bf16.mxu0 0
        %1452 = vmatpush2.bf16.msra.mxu0 %v1397
        %1453 = vmatprep.mubr.bf16.mxu0 %v1290
        %1454 = vmatmul.mubr.bf16.gmra.mxu0 %v1289
        %v1455 = vpop.f32.mrf.mxu0
        %v1456 = vadd.f32 0.0, %v1455
        %v1457 = vpop.f32.mrf.mxu0
        %v1458 = vpop.f32.mrf.mxu0
        %v1459 = vadd.f32 0.0, %v1458
        %v1460 = vpop.f32.mrf.mxu0
        %1461 = vmatprep.mubr.bf16.mxu0 %v1292
        %1462 = vmatmul.mubr.bf16.gmra.mxu0 %v1291
        %v1463 = vpop.f32.mrf.mxu0
        %v1464 = vadd.f32 0.0, %v1463
        %v1465 = vpop.f32.mrf.mxu0
        %v1466 = vpop.f32.mrf.mxu0
        %v1467 = vadd.f32 0.0, %v1466
        %v1468 = vpop.f32.mrf.mxu0
        %1469 = vdwg.mxu0
        %vm1470 = vcmask 982016
        %1471 = vst.msk [vmem:[%s342] sm:$0xff] %vm1470, %v1456
        %1472 = vst.msk [vmem:[%s342 + $0x8] sm:$0xff] %vm1470, %v1459
        %1473 = vst.msk [vmem:[%s342 + $0x10] sm:$0xff] %vm1470, %v1464
        %1474 = vst.msk [vmem:[%s342 + $0x18] sm:$0xff] %vm1470, %v1467
        %v1475 = vpack.c.bf16 %v1459, %v1456
        %v1476 = vpack.c.bf16 %v1467, %v1464
        %v1477 = vld [vmem:[#allocation5] sm:$0xff]
        %v1478 = vld [vmem:[#allocation5 + $0x8] sm:$0xff]
        %v1479 = vld [vmem:[#allocation5 + $0x10] sm:$0xff]
        %v1480 = vld [vmem:[#allocation5 + $0x18] sm:$0xff]
        %v1481 = vld [vmem:[#allocation5 + $0x20] sm:$0xff]
        %v1482 = vld [vmem:[#allocation5 + $0x28] sm:$0xff]
        %v1483 = vld [vmem:[#allocation5 + $0x30] sm:$0xff]
        %v1484 = vld [vmem:[#allocation5 + $0x38] sm:$0xff]
        %v1485 = vld [vmem:[#allocation5 + $0x40] sm:$0xff]
        %v1486 = vld [vmem:[#allocation5 + $0x48] sm:$0xff]
        %v1487 = vld [vmem:[#allocation5 + $0x50] sm:$0xff]
        %v1488 = vld [vmem:[#allocation5 + $0x58] sm:$0xff]
        %v1489 = vld [vmem:[#allocation5 + $0x60] sm:$0xff]
        %v1490 = vld [vmem:[#allocation5 + $0x68] sm:$0xff]
        %v1491 = vld [vmem:[#allocation5 + $0x70] sm:$0xff]
        %v1507 = vunpack.c.l.b16 %v1477
        %v1508 = vunpack.c.h.b16 %v1477
        %v1509 = vunpack.c.l.b16 %v1478
        %v1510 = vunpack.c.h.b16 %v1478
        %v1511 = vunpack.c.l.b16 %v1479
        %v1512 = vunpack.c.h.b16 %v1479
        %v1513 = vunpack.c.l.b16 %v1480
        %v1514 = vunpack.c.h.b16 %v1480
        %v1515 = vunpack.c.l.b16 %v1481
        %v1516 = vunpack.c.h.b16 %v1481
        %v1517 = vunpack.c.l.b16 %v1482
        %v1518 = vunpack.c.h.b16 %v1482
        %v1519 = vunpack.c.l.b16 %v1483
        %v1520 = vunpack.c.h.b16 %v1483
        %v1521 = vunpack.c.l.b16 %v1484
        %v1522 = vunpack.c.h.b16 %v1484
        %v1523 = vunpack.c.l.b16 %v1485
        %v1524 = vunpack.c.h.b16 %v1485
        %v1525 = vunpack.c.l.b16 %v1486
        %v1526 = vunpack.c.h.b16 %v1486
        %v1527 = vunpack.c.l.b16 %v1487
        %v1528 = vunpack.c.h.b16 %v1487
        %v1529 = vunpack.c.l.b16 %v1488
        %v1530 = vunpack.c.h.b16 %v1488
        %v1531 = vunpack.c.l.b16 %v1489
        %v1532 = vunpack.c.h.b16 %v1489
        %v1533 = vunpack.c.l.b16 %v1490
        %v1534 = vunpack.c.h.b16 %v1490
        %v1535 = vunpack.c.l.b16 %v1491
        %v1536 = vunpack.c.h.b16 %v1491
        %v1537 = vpack.c.b16 %v1509, %v1507
        %v1538 = vpack.c.b16 %v1510, %v1508
        %v1539 = vpack.c.b16 %v1513, %v1511
        %v1540 = vpack.c.b16 %v1514, %v1512
        %v1541 = vpack.c.b16 %v1517, %v1515
        %v1542 = vpack.c.b16 %v1518, %v1516
        %v1543 = vpack.c.b16 %v1521, %v1519
        %v1544 = vpack.c.b16 %v1522, %v1520
        %v1545 = vpack.c.b16 %v1525, %v1523
        %v1546 = vpack.c.b16 %v1526, %v1524
        %v1547 = vpack.c.b16 %v1529, %v1527
        %v1548 = vpack.c.b16 %v1530, %v1528
        %v1549 = vpack.c.b16 %v1533, %v1531
        %v1550 = vpack.c.b16 %v1534, %v1532
        %v1551 = vpack.c.b16 %v1535, %v1535
        %v1552 = vpack.c.b16 %v1536, %v1536
        %v1568 = vsel %vm1470, %v1475, 0
        %v1571 = vsel %vm1470, %v1476, 0
        %v1574 = vsel %vm672, %v1551, 0
        %v1577 = vsel %vm672, %v1552, 0
        %1579 = vmatprep.subr.bf16.mxu0 %v1577
        %1580 = vmatpush1.bf16.msra.mxu0 %v1574
        %1581 = vmatprep.subr.bf16.mxu0 %v1550
        %1582 = vmatpush1.bf16.msra.mxu0 %v1549
        %1583 = vmatprep.subr.bf16.mxu0 %v1548
        %1584 = vmatpush1.bf16.msra.mxu0 %v1547
        %1585 = vmatprep.subr.bf16.mxu0 %v1546
        %1586 = vmatpush1.bf16.msra.mxu0 %v1545
        %1587 = vmatprep.subr.bf16.mxu0 %v1544
        %1588 = vmatpush1.bf16.msra.mxu0 %v1543
        %1589 = vmatprep.subr.bf16.mxu0 %v1542
        %1590 = vmatpush1.bf16.msra.mxu0 %v1541
        %1591 = vmatprep.subr.bf16.mxu0 %v1540
        %1592 = vmatpush1.bf16.msra.mxu0 %v1539
        %1593 = vmatprep.subr.bf16.mxu0 %v1538
        %1594 = vmatpush1.bf16.msra.mxu0 %v1537
        %1595 = vmatprep.subr.bf16.mxu0 0
        %1596 = vmatpush2.bf16.msra.mxu0 0
        %1597 = vmatprep.subr.bf16.mxu0 0
        %1598 = vmatpush2.bf16.msra.mxu0 0
        %1599 = vmatprep.subr.bf16.mxu0 0
        %1600 = vmatpush2.bf16.msra.mxu0 0
        %1601 = vmatprep.subr.bf16.mxu0 0
        %1602 = vmatpush2.bf16.msra.mxu0 0
        %1603 = vmatprep.subr.bf16.mxu0 0
        %1604 = vmatpush2.bf16.msra.mxu0 0
        %1605 = vmatprep.subr.bf16.mxu0 0
        %1606 = vmatpush2.bf16.msra.mxu0 0
        %1607 = vmatprep.subr.bf16.mxu0 0
        %1608 = vmatpush2.bf16.msra.mxu0 0
        %1609 = vmatprep.subr.bf16.mxu0 0
        %1610 = vmatpush2.bf16.msra.mxu0 0
        %1611 = vmatprep.mubr.bf16.mxu0 0
        %1612 = vmatmul.mubr.bf16.gmra.mxu0 %v1568
        %v1613 = vpop.f32.mrf.mxu0
        %v1614 = vadd.f32 0.0, %v1613
        %v1615 = vpop.f32.mrf.mxu0
        %v1616 = vadd.f32 0.0, %v1615
        %v1617 = vpop.f32.mrf.mxu0
        %v1618 = vadd.f32 0.0, %v1617
        %v1619 = vpop.f32.mrf.mxu0
        %v1620 = vadd.f32 0.0, %v1619
        %1621 = vmatprep.mubr.bf16.mxu0 0
        %1622 = vmatmul.mubr.bf16.gmra.mxu0 %v1571
        %v1623 = vpop.f32.mrf.mxu0
        %v1624 = vadd.f32 0.0, %v1623
        %v1625 = vpop.f32.mrf.mxu0
        %v1626 = vadd.f32 0.0, %v1625
        %v1627 = vpop.f32.mrf.mxu0
        %v1628 = vadd.f32 0.0, %v1627
        %v1629 = vpop.f32.mrf.mxu0
        %v1630 = vadd.f32 0.0, %v1629
        %1631 = vdwg.mxu0
        %v1632 = vpack.c.bf16 %v1618, %v1614
        %v1633 = vpack.c.bf16 %v1620, %v1616
        %v1634 = vpack.c.bf16 %v1628, %v1624
        %v1635 = vpack.c.bf16 %v1630, %v1626
        %v1636 = vld [vmem:[%s5] sm:$0xff]
        %v1637 = vld [vmem:[%s5 + $0x8] sm:$0xff]
        %v1638 = vld [vmem:[%s5 + $0x10] sm:$0xff]
        %v1639 = vld [vmem:[%s5 + $0x18] sm:$0xff]
        %v1640 = vld [vmem:[%s5 + $0x20] sm:$0xff]
        %v1641 = vld [vmem:[%s5 + $0x28] sm:$0xff]
        %v1642 = vld [vmem:[%s5 + $0x30] sm:$0xff]
        %v1643 = vld [vmem:[%s5 + $0x38] sm:$0xff]
        %v1644 = vld [vmem:[%s5 + $0x40] sm:$0xff]
        %v1645 = vld [vmem:[%s5 + $0x48] sm:$0xff]
        %v1646 = vld [vmem:[%s5 + $0x50] sm:$0xff]
        %v1647 = vld [vmem:[%s5 + $0x58] sm:$0xff]
        %v1648 = vld [vmem:[%s5 + $0x60] sm:$0xff]
        %v1649 = vld [vmem:[%s5 + $0x68] sm:$0xff]
        %v1650 = vld [vmem:[%s5 + $0x70] sm:$0xff]
        %v1651 = vld [vmem:[%s5 + $0x78] sm:$0xff]
        %v1652 = vld [vmem:[%s5 + $0x80] sm:$0xff]
        %v1653 = vld [vmem:[%s5 + $0x88] sm:$0xff]
        %v1654 = vld [vmem:[%s5 + $0x90] sm:$0xff]
        %v1655 = vld [vmem:[%s5 + $0x98] sm:$0xff]
        %v1656 = vld [vmem:[%s5 + $0xa0] sm:$0xff]
        %v1657 = vld [vmem:[%s5 + $0xa8] sm:$0xff]
        %v1658 = vld [vmem:[%s5 + $0xb0] sm:$0xff]
        %v1659 = vld [vmem:[%s5 + $0xb8] sm:$0xff]
        %v1660 = vld [vmem:[%s5 + $0xc0] sm:$0xff]
        %v1661 = vld [vmem:[%s5 + $0xc8] sm:$0xff]
        %v1662 = vld [vmem:[%s5 + $0xd0] sm:$0xff]
        %v1663 = vld [vmem:[%s5 + $0xd8] sm:$0xff]
        %v1664 = vld [vmem:[%s5 + $0xe0] sm:$0xff]
        %v1665 = vld [vmem:[%s5 + $0xe8] sm:$0xff]
        %v1666 = vld [vmem:[%s5 + $0xf0] sm:$0xff]
        %v1667 = vld [vmem:[%s5 + $0xf8] sm:$0xff]
        %v1668 = vld [vmem:[%s5 + $0x100] sm:$0xff]
        %v1669 = vld [vmem:[%s5 + $0x108] sm:$0xff]
        %v1670 = vld [vmem:[%s5 + $0x110] sm:$0xff]
        %v1671 = vld [vmem:[%s5 + $0x118] sm:$0xff]
        %v1672 = vld [vmem:[%s5 + $0x120] sm:$0xff]
        %v1673 = vld [vmem:[%s5 + $0x128] sm:$0xff]
        %v1674 = vld [vmem:[%s5 + $0x130] sm:$0xff]
        %v1675 = vld [vmem:[%s5 + $0x138] sm:$0xff]
        %v1676 = vld [vmem:[%s5 + $0x140] sm:$0xff]
        %v1677 = vld [vmem:[%s5 + $0x148] sm:$0xff]
        %v1678 = vld [vmem:[%s5 + $0x150] sm:$0xff]
        %v1679 = vld [vmem:[%s5 + $0x158] sm:$0xff]
        %v1680 = vld [vmem:[%s5 + $0x160] sm:$0xff]
        %v1681 = vld [vmem:[%s5 + $0x168] sm:$0xff]
        %v1682 = vld [vmem:[%s5 + $0x170] sm:$0xff]
        %v1683 = vld [vmem:[%s5 + $0x178] sm:$0xff]
        %v1684 = vld [vmem:[%s5 + $0x180] sm:$0xff]
        %v1685 = vld [vmem:[%s5 + $0x188] sm:$0xff]
        %v1686 = vld [vmem:[%s5 + $0x190] sm:$0xff]
        %v1687 = vld [vmem:[%s5 + $0x198] sm:$0xff]
        %v1688 = vld [vmem:[%s5 + $0x1a0] sm:$0xff]
        %v1689 = vld [vmem:[%s5 + $0x1a8] sm:$0xff]
        %v1690 = vld [vmem:[%s5 + $0x1b0] sm:$0xff]
        %v1691 = vld [vmem:[%s5 + $0x1b8] sm:$0xff]
        %v1692 = vld [vmem:[%s5 + $0x1c0] sm:$0xff]
        %v1693 = vld [vmem:[%s5 + $0x1c8] sm:$0xff]
        %v1694 = vld [vmem:[%s5 + $0x1d0] sm:$0xff]
        %v1695 = vld [vmem:[%s5 + $0x1d8] sm:$0xff]
        %v1696 = vld [vmem:[%s5 + $0x1e0] sm:$0xff]
        %v1697 = vld [vmem:[%s5 + $0x1e8] sm:$0xff]
        %v1698 = vld [vmem:[%s5 + $0x1f0] sm:$0xff]
        %v1699 = vld [vmem:[%s5 + $0x1f8] sm:$0xff]
        %v1764 = vunpack.c.l.b16 %v1636
        %v1765 = vunpack.c.h.b16 %v1636
        %v1766 = vunpack.c.l.b16 %v1637
        %v1767 = vunpack.c.h.b16 %v1637
        %v1768 = vunpack.c.l.b16 %v1638
        %v1769 = vunpack.c.h.b16 %v1638
        %v1770 = vunpack.c.l.b16 %v1639
        %v1771 = vunpack.c.h.b16 %v1639
        %v1772 = vunpack.c.l.b16 %v1640
        %v1773 = vunpack.c.h.b16 %v1640
        %v1774 = vunpack.c.l.b16 %v1641
        %v1775 = vunpack.c.h.b16 %v1641
        %v1776 = vunpack.c.l.b16 %v1642
        %v1777 = vunpack.c.h.b16 %v1642
        %v1778 = vunpack.c.l.b16 %v1643
        %v1779 = vunpack.c.h.b16 %v1643
        %v1780 = vunpack.c.l.b16 %v1644
        %v1781 = vunpack.c.h.b16 %v1644
        %v1782 = vunpack.c.l.b16 %v1645
        %v1783 = vunpack.c.h.b16 %v1645
        %v1784 = vunpack.c.l.b16 %v1646
        %v1785 = vunpack.c.h.b16 %v1646
        %v1786 = vunpack.c.l.b16 %v1647
        %v1787 = vunpack.c.h.b16 %v1647
        %v1788 = vunpack.c.l.b16 %v1648
        %v1789 = vunpack.c.h.b16 %v1648
        %v1790 = vunpack.c.l.b16 %v1649
        %v1791 = vunpack.c.h.b16 %v1649
        %v1792 = vunpack.c.l.b16 %v1650
        %v1793 = vunpack.c.h.b16 %v1650
        %v1794 = vunpack.c.l.b16 %v1651
        %v1795 = vunpack.c.h.b16 %v1651
        %v1796 = vunpack.c.l.b16 %v1652
        %v1797 = vunpack.c.h.b16 %v1652
        %v1798 = vunpack.c.l.b16 %v1653
        %v1799 = vunpack.c.h.b16 %v1653
        %v1800 = vunpack.c.l.b16 %v1654
        %v1801 = vunpack.c.h.b16 %v1654
        %v1802 = vunpack.c.l.b16 %v1655
        %v1803 = vunpack.c.h.b16 %v1655
        %v1804 = vunpack.c.l.b16 %v1656
        %v1805 = vunpack.c.h.b16 %v1656
        %v1806 = vunpack.c.l.b16 %v1657
        %v1807 = vunpack.c.h.b16 %v1657
        %v1808 = vunpack.c.l.b16 %v1658
        %v1809 = vunpack.c.h.b16 %v1658
        %v1810 = vunpack.c.l.b16 %v1659
        %v1811 = vunpack.c.h.b16 %v1659
        %v1812 = vunpack.c.l.b16 %v1660
        %v1813 = vunpack.c.h.b16 %v1660
        %v1814 = vunpack.c.l.b16 %v1661
        %v1815 = vunpack.c.h.b16 %v1661
        %v1816 = vunpack.c.l.b16 %v1662
        %v1817 = vunpack.c.h.b16 %v1662
        %v1818 = vunpack.c.l.b16 %v1663
        %v1819 = vunpack.c.h.b16 %v1663
        %v1820 = vunpack.c.l.b16 %v1664
        %v1821 = vunpack.c.h.b16 %v1664
        %v1822 = vunpack.c.l.b16 %v1665
        %v1823 = vunpack.c.h.b16 %v1665
        %v1824 = vunpack.c.l.b16 %v1666
        %v1825 = vunpack.c.h.b16 %v1666
        %v1826 = vunpack.c.l.b16 %v1667
        %v1827 = vunpack.c.h.b16 %v1667
        %v1828 = vunpack.c.l.b16 %v1668
        %v1829 = vunpack.c.h.b16 %v1668
        %v1830 = vunpack.c.l.b16 %v1669
        %v1831 = vunpack.c.h.b16 %v1669
        %v1832 = vunpack.c.l.b16 %v1670
        %v1833 = vunpack.c.h.b16 %v1670
        %v1834 = vunpack.c.l.b16 %v1671
        %v1835 = vunpack.c.h.b16 %v1671
        %v1836 = vunpack.c.l.b16 %v1672
        %v1837 = vunpack.c.h.b16 %v1672
        %v1838 = vunpack.c.l.b16 %v1673
        %v1839 = vunpack.c.h.b16 %v1673
        %v1840 = vunpack.c.l.b16 %v1674
        %v1841 = vunpack.c.h.b16 %v1674
        %v1842 = vunpack.c.l.b16 %v1675
        %v1843 = vunpack.c.h.b16 %v1675
        %v1844 = vunpack.c.l.b16 %v1676
        %v1845 = vunpack.c.h.b16 %v1676
        %v1846 = vunpack.c.l.b16 %v1677
        %v1847 = vunpack.c.h.b16 %v1677
        %v1848 = vunpack.c.l.b16 %v1678
        %v1849 = vunpack.c.h.b16 %v1678
        %v1850 = vunpack.c.l.b16 %v1679
        %v1851 = vunpack.c.h.b16 %v1679
        %v1852 = vunpack.c.l.b16 %v1680
        %v1853 = vunpack.c.h.b16 %v1680
        %v1854 = vunpack.c.l.b16 %v1681
        %v1855 = vunpack.c.h.b16 %v1681
        %v1856 = vunpack.c.l.b16 %v1682
        %v1857 = vunpack.c.h.b16 %v1682
        %v1858 = vunpack.c.l.b16 %v1683
        %v1859 = vunpack.c.h.b16 %v1683
        %v1860 = vunpack.c.l.b16 %v1684
        %v1861 = vunpack.c.h.b16 %v1684
        %v1862 = vunpack.c.l.b16 %v1685
        %v1863 = vunpack.c.h.b16 %v1685
        %v1864 = vunpack.c.l.b16 %v1686
        %v1865 = vunpack.c.h.b16 %v1686
        %v1866 = vunpack.c.l.b16 %v1687
        %v1867 = vunpack.c.h.b16 %v1687
        %v1868 = vunpack.c.l.b16 %v1688
        %v1869 = vunpack.c.h.b16 %v1688
        %v1870 = vunpack.c.l.b16 %v1689
        %v1871 = vunpack.c.h.b16 %v1689
        %v1872 = vunpack.c.l.b16 %v1690
        %v1873 = vunpack.c.h.b16 %v1690
        %v1874 = vunpack.c.l.b16 %v1691
        %v1875 = vunpack.c.h.b16 %v1691
        %v1876 = vunpack.c.l.b16 %v1692
        %v1877 = vunpack.c.h.b16 %v1692
        %v1878 = vunpack.c.l.b16 %v1693
        %v1879 = vunpack.c.h.b16 %v1693
        %v1880 = vunpack.c.l.b16 %v1694
        %v1881 = vunpack.c.h.b16 %v1694
        %v1882 = vunpack.c.l.b16 %v1695
        %v1883 = vunpack.c.h.b16 %v1695
        %v1884 = vunpack.c.l.b16 %v1696
        %v1885 = vunpack.c.h.b16 %v1696
        %v1886 = vunpack.c.l.b16 %v1697
        %v1887 = vunpack.c.h.b16 %v1697
        %v1888 = vunpack.c.l.b16 %v1698
        %v1889 = vunpack.c.h.b16 %v1698
        %v1890 = vunpack.c.l.b16 %v1699
        %v1891 = vunpack.c.h.b16 %v1699
        %v1892 = vpack.c.b16 %v1768, %v1764
        %v1893 = vpack.c.b16 %v1769, %v1765
        %v1894 = vpack.c.b16 %v1770, %v1766
        %v1895 = vpack.c.b16 %v1771, %v1767
        %v1896 = vpack.c.b16 %v1776, %v1772
        %v1897 = vpack.c.b16 %v1777, %v1773
        %v1898 = vpack.c.b16 %v1778, %v1774
        %v1899 = vpack.c.b16 %v1779, %v1775
        %v1900 = vpack.c.b16 %v1784, %v1780
        %v1901 = vpack.c.b16 %v1785, %v1781
        %v1902 = vpack.c.b16 %v1786, %v1782
        %v1903 = vpack.c.b16 %v1787, %v1783
        %v1904 = vpack.c.b16 %v1792, %v1788
        %v1905 = vpack.c.b16 %v1793, %v1789
        %v1906 = vpack.c.b16 %v1794, %v1790
        %v1907 = vpack.c.b16 %v1795, %v1791
        %v1908 = vpack.c.b16 %v1800, %v1796
        %v1909 = vpack.c.b16 %v1801, %v1797
        %v1910 = vpack.c.b16 %v1802, %v1798
        %v1911 = vpack.c.b16 %v1803, %v1799
        %v1912 = vpack.c.b16 %v1808, %v1804
        %v1913 = vpack.c.b16 %v1809, %v1805
        %v1914 = vpack.c.b16 %v1810, %v1806
        %v1915 = vpack.c.b16 %v1811, %v1807
        %v1916 = vpack.c.b16 %v1816, %v1812
        %v1917 = vpack.c.b16 %v1817, %v1813
        %v1918 = vpack.c.b16 %v1818, %v1814
        %v1919 = vpack.c.b16 %v1819, %v1815
        %v1920 = vpack.c.b16 %v1824, %v1820
        %v1921 = vpack.c.b16 %v1825, %v1821
        %v1922 = vpack.c.b16 %v1826, %v1822
        %v1923 = vpack.c.b16 %v1827, %v1823
        %v1924 = vpack.c.b16 %v1832, %v1828
        %v1925 = vpack.c.b16 %v1833, %v1829
        %v1926 = vpack.c.b16 %v1834, %v1830
        %v1927 = vpack.c.b16 %v1835, %v1831
        %v1928 = vpack.c.b16 %v1840, %v1836
        %v1929 = vpack.c.b16 %v1841, %v1837
        %v1930 = vpack.c.b16 %v1842, %v1838
        %v1931 = vpack.c.b16 %v1843, %v1839
        %v1932 = vpack.c.b16 %v1848, %v1844
        %v1933 = vpack.c.b16 %v1849, %v1845
        %v1934 = vpack.c.b16 %v1850, %v1846
        %v1935 = vpack.c.b16 %v1851, %v1847
        %v1936 = vpack.c.b16 %v1856, %v1852
        %v1937 = vpack.c.b16 %v1857, %v1853
        %v1938 = vpack.c.b16 %v1858, %v1854
        %v1939 = vpack.c.b16 %v1859, %v1855
        %v1940 = vpack.c.b16 %v1864, %v1860
        %v1941 = vpack.c.b16 %v1865, %v1861
        %v1942 = vpack.c.b16 %v1866, %v1862
        %v1943 = vpack.c.b16 %v1867, %v1863
        %v1944 = vpack.c.b16 %v1872, %v1868
        %v1945 = vpack.c.b16 %v1873, %v1869
        %v1946 = vpack.c.b16 %v1874, %v1870
        %v1947 = vpack.c.b16 %v1875, %v1871
        %v1948 = vpack.c.b16 %v1880, %v1876
        %v1949 = vpack.c.b16 %v1881, %v1877
        %v1950 = vpack.c.b16 %v1882, %v1878
        %v1951 = vpack.c.b16 %v1883, %v1879
        %v1952 = vpack.c.b16 %v1888, %v1884
        %v1953 = vpack.c.b16 %v1889, %v1885
        %v1954 = vpack.c.b16 %v1890, %v1886
        %v1955 = vpack.c.b16 %v1891, %v1887
        %2020 = vmatprep.subr.bf16.mxu0 %v1921
        %2021 = vmatpush1.bf16.msra.mxu0 %v1920
        %2022 = vmatprep.subr.bf16.mxu0 %v1917
        %2023 = vmatpush1.bf16.msra.mxu0 %v1916
        %2024 = vmatprep.subr.bf16.mxu0 %v1913
        %2025 = vmatpush1.bf16.msra.mxu0 %v1912
        %2026 = vmatprep.subr.bf16.mxu0 %v1909
        %2027 = vmatpush1.bf16.msra.mxu0 %v1908
        %2028 = vmatprep.subr.bf16.mxu0 %v1905
        %2029 = vmatpush1.bf16.msra.mxu0 %v1904
        %2030 = vmatprep.subr.bf16.mxu0 %v1901
        %2031 = vmatpush1.bf16.msra.mxu0 %v1900
        %2032 = vmatprep.subr.bf16.mxu0 %v1897
        %2033 = vmatpush1.bf16.msra.mxu0 %v1896
        %2034 = vmatprep.subr.bf16.mxu0 %v1893
        %2035 = vmatpush1.bf16.msra.mxu0 %v1892
        %2036 = vmatprep.subr.bf16.mxu0 %v1953
        %2037 = vmatpush2.bf16.msra.mxu0 %v1952
        %2038 = vmatprep.subr.bf16.mxu0 %v1949
        %2039 = vmatpush2.bf16.msra.mxu0 %v1948
        %2040 = vmatprep.subr.bf16.mxu0 %v1945
        %2041 = vmatpush2.bf16.msra.mxu0 %v1944
        %2042 = vmatprep.subr.bf16.mxu0 %v1941
        %2043 = vmatpush2.bf16.msra.mxu0 %v1940
        %2044 = vmatprep.subr.bf16.mxu0 %v1937
        %2045 = vmatpush2.bf16.msra.mxu0 %v1936
        %2046 = vmatprep.subr.bf16.mxu0 %v1933
        %2047 = vmatpush2.bf16.msra.mxu0 %v1932
        %2048 = vmatprep.subr.bf16.mxu0 %v1929
        %2049 = vmatpush2.bf16.msra.mxu0 %v1928
        %2050 = vmatprep.subr.bf16.mxu0 %v1925
        %2051 = vmatpush2.bf16.msra.mxu0 %v1924
        %2052 = vmatprep.mubr.bf16.mxu0 %v1633
        %2053 = vmatmul.mubr.bf16.gmra.mxu0 %v1632
        %v2054 = vpop.f32.mrf.mxu0
        %v2055 = vadd.f32 0.0, %v2054
        %v2056 = vpop.f32.mrf.mxu0
        %v2057 = vadd.f32 0.0, %v2056
        %v2058 = vpop.f32.mrf.mxu0
        %v2059 = vadd.f32 0.0, %v2058
        %v2060 = vpop.f32.mrf.mxu0
        %v2061 = vadd.f32 0.0, %v2060
        %2062 = vmatprep.mubr.bf16.mxu0 %v1635
        %2063 = vmatmul.mubr.bf16.gmra.mxu0 %v1634
        %v2064 = vpop.f32.mrf.mxu0
        %v2065 = vadd.f32 0.0, %v2064
        %v2066 = vpop.f32.mrf.mxu0
        %v2067 = vadd.f32 0.0, %v2066
        %v2068 = vpop.f32.mrf.mxu0
        %v2069 = vadd.f32 0.0, %v2068
        %v2070 = vpop.f32.mrf.mxu0
        %v2071 = vadd.f32 0.0, %v2070
        %2072 = vdwg.mxu0
        %2073 = vmatprep.subr.bf16.mxu0 %v1923
        %2074 = vmatpush1.bf16.msra.mxu0 %v1922
        %2075 = vmatprep.subr.bf16.mxu0 %v1919
        %2076 = vmatpush1.bf16.msra.mxu0 %v1918
        %2077 = vmatprep.subr.bf16.mxu0 %v1915
        %2078 = vmatpush1.bf16.msra.mxu0 %v1914
        %2079 = vmatprep.subr.bf16.mxu0 %v1911
        %2080 = vmatpush1.bf16.msra.mxu0 %v1910
        %2081 = vmatprep.subr.bf16.mxu0 %v1907
        %2082 = vmatpush1.bf16.msra.mxu0 %v1906
        %2083 = vmatprep.subr.bf16.mxu0 %v1903
        %2084 = vmatpush1.bf16.msra.mxu0 %v1902
        %2085 = vmatprep.subr.bf16.mxu0 %v1899
        %2086 = vmatpush1.bf16.msra.mxu0 %v1898
        %2087 = vmatprep.subr.bf16.mxu0 %v1895
        %2088 = vmatpush1.bf16.msra.mxu0 %v1894
        %2089 = vmatprep.subr.bf16.mxu0 %v1955
        %2090 = vmatpush2.bf16.msra.mxu0 %v1954
        %2091 = vmatprep.subr.bf16.mxu0 %v1951
        %2092 = vmatpush2.bf16.msra.mxu0 %v1950
        %2093 = vmatprep.subr.bf16.mxu0 %v1947
        %2094 = vmatpush2.bf16.msra.mxu0 %v1946
        %2095 = vmatprep.subr.bf16.mxu0 %v1943
        %2096 = vmatpush2.bf16.msra.mxu0 %v1942
        %2097 = vmatprep.subr.bf16.mxu0 %v1939
        %2098 = vmatpush2.bf16.msra.mxu0 %v1938
        %2099 = vmatprep.subr.bf16.mxu0 %v1935
        %2100 = vmatpush2.bf16.msra.mxu0 %v1934
        %2101 = vmatprep.subr.bf16.mxu0 %v1931
        %2102 = vmatpush2.bf16.msra.mxu0 %v1930
        %2103 = vmatprep.subr.bf16.mxu0 %v1927
        %2104 = vmatpush2.bf16.msra.mxu0 %v1926
        %2105 = vmatprep.mubr.bf16.mxu0 %v1633
        %2106 = vmatmul.mubr.bf16.gmra.mxu0 %v1632
        %v2107 = vpop.f32.mrf.mxu0
        %v2108 = vadd.f32 0.0, %v2107
        %v2109 = vpop.f32.mrf.mxu0
        %v2110 = vadd.f32 0.0, %v2109
        %v2111 = vpop.f32.mrf.mxu0
        %v2112 = vadd.f32 0.0, %v2111
        %v2113 = vpop.f32.mrf.mxu0
        %v2114 = vadd.f32 0.0, %v2113
        %2115 = vmatprep.mubr.bf16.mxu0 %v1635
        %2116 = vmatmul.mubr.bf16.gmra.mxu0 %v1634
        %v2117 = vpop.f32.mrf.mxu0
        %v2118 = vadd.f32 0.0, %v2117
        %v2119 = vpop.f32.mrf.mxu0
        %v2120 = vadd.f32 0.0, %v2119
        %v2121 = vpop.f32.mrf.mxu0
        %v2122 = vadd.f32 0.0, %v2121
        %v2123 = vpop.f32.mrf.mxu0
        %v2124 = vadd.f32 0.0, %v2123
        %2125 = vdwg.mxu0
        %v2126 = vpack.c.bf16 %v2059, %v2055
        %v2127 = vpack.c.bf16 %v2061, %v2057
        %v2128 = vpack.c.bf16 %v2112, %v2108
        %v2129 = vpack.c.bf16 %v2114, %v2110
        %v2130 = vpack.c.bf16 %v2069, %v2065
        %v2131 = vpack.c.bf16 %v2071, %v2067
        %v2132 = vpack.c.bf16 %v2122, %v2118
        %v2133 = vpack.c.bf16 %v2124, %v2120
        %v2134 = vld [vmem:[%s6] sm:$0xff]
        %v2135 = vld [vmem:[%s6 + $0x8] sm:$0xff]
        %v2136 = vld [vmem:[%s6 + $0x10] sm:$0xff]
        %v2137 = vld [vmem:[%s6 + $0x18] sm:$0xff]
        %v2138 = vld [vmem:[%s6 + $0x20] sm:$0xff]
        %v2139 = vld [vmem:[%s6 + $0x28] sm:$0xff]
        %v2140 = vld [vmem:[%s6 + $0x30] sm:$0xff]
        %v2141 = vld [vmem:[%s6 + $0x38] sm:$0xff]
        %v2142 = vld [vmem:[%s6 + $0x40] sm:$0xff]
        %v2143 = vld [vmem:[%s6 + $0x48] sm:$0xff]
        %v2144 = vld [vmem:[%s6 + $0x50] sm:$0xff]
        %v2145 = vld [vmem:[%s6 + $0x58] sm:$0xff]
        %v2146 = vld [vmem:[%s6 + $0x60] sm:$0xff]
        %v2147 = vld [vmem:[%s6 + $0x68] sm:$0xff]
        %v2148 = vld [vmem:[%s6 + $0x70] sm:$0xff]
        %v2149 = vld [vmem:[%s6 + $0x78] sm:$0xff]
        %v2150 = vld [vmem:[%s6 + $0x80] sm:$0xff]
        %v2151 = vld [vmem:[%s6 + $0x88] sm:$0xff]
        %v2152 = vld [vmem:[%s6 + $0x90] sm:$0xff]
        %v2153 = vld [vmem:[%s6 + $0x98] sm:$0xff]
        %v2154 = vld [vmem:[%s6 + $0xa0] sm:$0xff]
        %v2155 = vld [vmem:[%s6 + $0xa8] sm:$0xff]
        %v2156 = vld [vmem:[%s6 + $0xb0] sm:$0xff]
        %v2157 = vld [vmem:[%s6 + $0xb8] sm:$0xff]
        %v2158 = vld [vmem:[%s6 + $0xc0] sm:$0xff]
        %v2159 = vld [vmem:[%s6 + $0xc8] sm:$0xff]
        %v2160 = vld [vmem:[%s6 + $0xd0] sm:$0xff]
        %v2161 = vld [vmem:[%s6 + $0xd8] sm:$0xff]
        %v2162 = vld [vmem:[%s6 + $0xe0] sm:$0xff]
        %v2163 = vld [vmem:[%s6 + $0xe8] sm:$0xff]
        %v2164 = vld [vmem:[%s6 + $0xf0] sm:$0xff]
        %v2165 = vld [vmem:[%s6 + $0xf8] sm:$0xff]
        %v2166 = vld [vmem:[%s6 + $0x100] sm:$0xff]
        %v2167 = vld [vmem:[%s6 + $0x108] sm:$0xff]
        %v2168 = vld [vmem:[%s6 + $0x110] sm:$0xff]
        %v2169 = vld [vmem:[%s6 + $0x118] sm:$0xff]
        %v2170 = vld [vmem:[%s6 + $0x120] sm:$0xff]
        %v2171 = vld [vmem:[%s6 + $0x128] sm:$0xff]
        %v2172 = vld [vmem:[%s6 + $0x130] sm:$0xff]
        %v2173 = vld [vmem:[%s6 + $0x138] sm:$0xff]
        %v2174 = vld [vmem:[%s6 + $0x140] sm:$0xff]
        %v2175 = vld [vmem:[%s6 + $0x148] sm:$0xff]
        %v2176 = vld [vmem:[%s6 + $0x150] sm:$0xff]
        %v2177 = vld [vmem:[%s6 + $0x158] sm:$0xff]
        %v2178 = vld [vmem:[%s6 + $0x160] sm:$0xff]
        %v2179 = vld [vmem:[%s6 + $0x168] sm:$0xff]
        %v2180 = vld [vmem:[%s6 + $0x170] sm:$0xff]
        %v2181 = vld [vmem:[%s6 + $0x178] sm:$0xff]
        %v2182 = vld [vmem:[%s6 + $0x180] sm:$0xff]
        %v2183 = vld [vmem:[%s6 + $0x188] sm:$0xff]
        %v2184 = vld [vmem:[%s6 + $0x190] sm:$0xff]
        %v2185 = vld [vmem:[%s6 + $0x198] sm:$0xff]
        %v2186 = vld [vmem:[%s6 + $0x1a0] sm:$0xff]
        %v2187 = vld [vmem:[%s6 + $0x1a8] sm:$0xff]
        %v2188 = vld [vmem:[%s6 + $0x1b0] sm:$0xff]
        %v2189 = vld [vmem:[%s6 + $0x1b8] sm:$0xff]
        %v2190 = vld [vmem:[%s6 + $0x1c0] sm:$0xff]
        %v2191 = vld [vmem:[%s6 + $0x1c8] sm:$0xff]
        %v2192 = vld [vmem:[%s6 + $0x1d0] sm:$0xff]
        %v2193 = vld [vmem:[%s6 + $0x1d8] sm:$0xff]
        %v2194 = vld [vmem:[%s6 + $0x1e0] sm:$0xff]
        %v2195 = vld [vmem:[%s6 + $0x1e8] sm:$0xff]
        %v2196 = vld [vmem:[%s6 + $0x1f0] sm:$0xff]
        %v2197 = vld [vmem:[%s6 + $0x1f8] sm:$0xff]
        %v2262 = vunpack.c.l.b16 %v2134
        %v2263 = vunpack.c.h.b16 %v2134
        %v2264 = vunpack.c.l.b16 %v2135
        %v2265 = vunpack.c.h.b16 %v2135
        %v2266 = vunpack.c.l.b16 %v2136
        %v2267 = vunpack.c.h.b16 %v2136
        %v2268 = vunpack.c.l.b16 %v2137
        %v2269 = vunpack.c.h.b16 %v2137
        %v2270 = vunpack.c.l.b16 %v2138
        %v2271 = vunpack.c.h.b16 %v2138
        %v2272 = vunpack.c.l.b16 %v2139
        %v2273 = vunpack.c.h.b16 %v2139
        %v2274 = vunpack.c.l.b16 %v2140
        %v2275 = vunpack.c.h.b16 %v2140
        %v2276 = vunpack.c.l.b16 %v2141
        %v2277 = vunpack.c.h.b16 %v2141
        %v2278 = vunpack.c.l.b16 %v2142
        %v2279 = vunpack.c.h.b16 %v2142
        %v2280 = vunpack.c.l.b16 %v2143
        %v2281 = vunpack.c.h.b16 %v2143
        %v2282 = vunpack.c.l.b16 %v2144
        %v2283 = vunpack.c.h.b16 %v2144
        %v2284 = vunpack.c.l.b16 %v2145
        %v2285 = vunpack.c.h.b16 %v2145
        %v2286 = vunpack.c.l.b16 %v2146
        %v2287 = vunpack.c.h.b16 %v2146
        %v2288 = vunpack.c.l.b16 %v2147
        %v2289 = vunpack.c.h.b16 %v2147
        %v2290 = vunpack.c.l.b16 %v2148
        %v2291 = vunpack.c.h.b16 %v2148
        %v2292 = vunpack.c.l.b16 %v2149
        %v2293 = vunpack.c.h.b16 %v2149
        %v2294 = vunpack.c.l.b16 %v2150
        %v2295 = vunpack.c.h.b16 %v2150
        %v2296 = vunpack.c.l.b16 %v2151
        %v2297 = vunpack.c.h.b16 %v2151
        %v2298 = vunpack.c.l.b16 %v2152
        %v2299 = vunpack.c.h.b16 %v2152
        %v2300 = vunpack.c.l.b16 %v2153
        %v2301 = vunpack.c.h.b16 %v2153
        %v2302 = vunpack.c.l.b16 %v2154
        %v2303 = vunpack.c.h.b16 %v2154
        %v2304 = vunpack.c.l.b16 %v2155
        %v2305 = vunpack.c.h.b16 %v2155
        %v2306 = vunpack.c.l.b16 %v2156
        %v2307 = vunpack.c.h.b16 %v2156
        %v2308 = vunpack.c.l.b16 %v2157
        %v2309 = vunpack.c.h.b16 %v2157
        %v2310 = vunpack.c.l.b16 %v2158
        %v2311 = vunpack.c.h.b16 %v2158
        %v2312 = vunpack.c.l.b16 %v2159
        %v2313 = vunpack.c.h.b16 %v2159
        %v2314 = vunpack.c.l.b16 %v2160
        %v2315 = vunpack.c.h.b16 %v2160
        %v2316 = vunpack.c.l.b16 %v2161
        %v2317 = vunpack.c.h.b16 %v2161
        %v2318 = vunpack.c.l.b16 %v2162
        %v2319 = vunpack.c.h.b16 %v2162
        %v2320 = vunpack.c.l.b16 %v2163
        %v2321 = vunpack.c.h.b16 %v2163
        %v2322 = vunpack.c.l.b16 %v2164
        %v2323 = vunpack.c.h.b16 %v2164
        %v2324 = vunpack.c.l.b16 %v2165
        %v2325 = vunpack.c.h.b16 %v2165
        %v2326 = vunpack.c.l.b16 %v2166
        %v2327 = vunpack.c.h.b16 %v2166
        %v2328 = vunpack.c.l.b16 %v2167
        %v2329 = vunpack.c.h.b16 %v2167
        %v2330 = vunpack.c.l.b16 %v2168
        %v2331 = vunpack.c.h.b16 %v2168
        %v2332 = vunpack.c.l.b16 %v2169
        %v2333 = vunpack.c.h.b16 %v2169
        %v2334 = vunpack.c.l.b16 %v2170
        %v2335 = vunpack.c.h.b16 %v2170
        %v2336 = vunpack.c.l.b16 %v2171
        %v2337 = vunpack.c.h.b16 %v2171
        %v2338 = vunpack.c.l.b16 %v2172
        %v2339 = vunpack.c.h.b16 %v2172
        %v2340 = vunpack.c.l.b16 %v2173
        %v2341 = vunpack.c.h.b16 %v2173
        %v2342 = vunpack.c.l.b16 %v2174
        %v2343 = vunpack.c.h.b16 %v2174
        %v2344 = vunpack.c.l.b16 %v2175
        %v2345 = vunpack.c.h.b16 %v2175
        %v2346 = vunpack.c.l.b16 %v2176
        %v2347 = vunpack.c.h.b16 %v2176
        %v2348 = vunpack.c.l.b16 %v2177
        %v2349 = vunpack.c.h.b16 %v2177
        %v2350 = vunpack.c.l.b16 %v2178
        %v2351 = vunpack.c.h.b16 %v2178
        %v2352 = vunpack.c.l.b16 %v2179
        %v2353 = vunpack.c.h.b16 %v2179
        %v2354 = vunpack.c.l.b16 %v2180
        %v2355 = vunpack.c.h.b16 %v2180
        %v2356 = vunpack.c.l.b16 %v2181
        %v2357 = vunpack.c.h.b16 %v2181
        %v2358 = vunpack.c.l.b16 %v2182
        %v2359 = vunpack.c.h.b16 %v2182
        %v2360 = vunpack.c.l.b16 %v2183
        %v2361 = vunpack.c.h.b16 %v2183
        %v2362 = vunpack.c.l.b16 %v2184
        %v2363 = vunpack.c.h.b16 %v2184
        %v2364 = vunpack.c.l.b16 %v2185
        %v2365 = vunpack.c.h.b16 %v2185
        %v2366 = vunpack.c.l.b16 %v2186
        %v2367 = vunpack.c.h.b16 %v2186
        %v2368 = vunpack.c.l.b16 %v2187
        %v2369 = vunpack.c.h.b16 %v2187
        %v2370 = vunpack.c.l.b16 %v2188
        %v2371 = vunpack.c.h.b16 %v2188
        %v2372 = vunpack.c.l.b16 %v2189
        %v2373 = vunpack.c.h.b16 %v2189
        %v2374 = vunpack.c.l.b16 %v2190
        %v2375 = vunpack.c.h.b16 %v2190
        %v2376 = vunpack.c.l.b16 %v2191
        %v2377 = vunpack.c.h.b16 %v2191
        %v2378 = vunpack.c.l.b16 %v2192
        %v2379 = vunpack.c.h.b16 %v2192
        %v2380 = vunpack.c.l.b16 %v2193
        %v2381 = vunpack.c.h.b16 %v2193
        %v2382 = vunpack.c.l.b16 %v2194
        %v2383 = vunpack.c.h.b16 %v2194
        %v2384 = vunpack.c.l.b16 %v2195
        %v2385 = vunpack.c.h.b16 %v2195
        %v2386 = vunpack.c.l.b16 %v2196
        %v2387 = vunpack.c.h.b16 %v2196
        %v2388 = vunpack.c.l.b16 %v2197
        %v2389 = vunpack.c.h.b16 %v2197
        %v2390 = vpack.c.b16 %v2264, %v2262
        %v2391 = vpack.c.b16 %v2265, %v2263
        %v2392 = vpack.c.b16 %v2268, %v2266
        %v2393 = vpack.c.b16 %v2269, %v2267
        %v2394 = vpack.c.b16 %v2272, %v2270
        %v2395 = vpack.c.b16 %v2273, %v2271
        %v2396 = vpack.c.b16 %v2276, %v2274
        %v2397 = vpack.c.b16 %v2277, %v2275
        %v2398 = vpack.c.b16 %v2280, %v2278
        %v2399 = vpack.c.b16 %v2281, %v2279
        %v2400 = vpack.c.b16 %v2284, %v2282
        %v2401 = vpack.c.b16 %v2285, %v2283
        %v2402 = vpack.c.b16 %v2288, %v2286
        %v2403 = vpack.c.b16 %v2289, %v2287
        %v2404 = vpack.c.b16 %v2292, %v2290
        %v2405 = vpack.c.b16 %v2293, %v2291
        %v2406 = vpack.c.b16 %v2296, %v2294
        %v2407 = vpack.c.b16 %v2297, %v2295
        %v2408 = vpack.c.b16 %v2300, %v2298
        %v2409 = vpack.c.b16 %v2301, %v2299
        %v2410 = vpack.c.b16 %v2304, %v2302
        %v2411 = vpack.c.b16 %v2305, %v2303
        %v2412 = vpack.c.b16 %v2308, %v2306
        %v2413 = vpack.c.b16 %v2309, %v2307
        %v2414 = vpack.c.b16 %v2312, %v2310
        %v2415 = vpack.c.b16 %v2313, %v2311
        %v2416 = vpack.c.b16 %v2316, %v2314
        %v2417 = vpack.c.b16 %v2317, %v2315
        %v2418 = vpack.c.b16 %v2320, %v2318
        %v2419 = vpack.c.b16 %v2321, %v2319
        %v2420 = vpack.c.b16 %v2324, %v2322
        %v2421 = vpack.c.b16 %v2325, %v2323
        %v2422 = vpack.c.b16 %v2328, %v2326
        %v2423 = vpack.c.b16 %v2329, %v2327
        %v2424 = vpack.c.b16 %v2332, %v2330
        %v2425 = vpack.c.b16 %v2333, %v2331
        %v2426 = vpack.c.b16 %v2336, %v2334
        %v2427 = vpack.c.b16 %v2337, %v2335
        %v2428 = vpack.c.b16 %v2340, %v2338
        %v2429 = vpack.c.b16 %v2341, %v2339
        %v2430 = vpack.c.b16 %v2344, %v2342
        %v2431 = vpack.c.b16 %v2345, %v2343
        %v2432 = vpack.c.b16 %v2348, %v2346
        %v2433 = vpack.c.b16 %v2349, %v2347
        %v2434 = vpack.c.b16 %v2352, %v2350
        %v2435 = vpack.c.b16 %v2353, %v2351
        %v2436 = vpack.c.b16 %v2356, %v2354
        %v2437 = vpack.c.b16 %v2357, %v2355
        %v2438 = vpack.c.b16 %v2360, %v2358
        %v2439 = vpack.c.b16 %v2361, %v2359
        %v2440 = vpack.c.b16 %v2364, %v2362
        %v2441 = vpack.c.b16 %v2365, %v2363
        %v2442 = vpack.c.b16 %v2368, %v2366
        %v2443 = vpack.c.b16 %v2369, %v2367
        %v2444 = vpack.c.b16 %v2372, %v2370
        %v2445 = vpack.c.b16 %v2373, %v2371
        %v2446 = vpack.c.b16 %v2376, %v2374
        %v2447 = vpack.c.b16 %v2377, %v2375
        %v2448 = vpack.c.b16 %v2380, %v2378
        %v2449 = vpack.c.b16 %v2381, %v2379
        %v2450 = vpack.c.b16 %v2384, %v2382
        %v2451 = vpack.c.b16 %v2385, %v2383
        %v2452 = vpack.c.b16 %v2388, %v2386
        %v2453 = vpack.c.b16 %v2389, %v2387
        %2518 = vmatprep.subr.bf16.mxu0 %v2405
        %2519 = vmatpush1.bf16.msra.mxu0 %v2404
        %2520 = vmatprep.subr.bf16.mxu0 %v2403
        %2521 = vmatpush1.bf16.msra.mxu0 %v2402
        %2522 = vmatprep.subr.bf16.mxu0 %v2401
        %2523 = vmatpush1.bf16.msra.mxu0 %v2400
        %2524 = vmatprep.subr.bf16.mxu0 %v2399
        %2525 = vmatpush1.bf16.msra.mxu0 %v2398
        %2526 = vmatprep.subr.bf16.mxu0 %v2397
        %2527 = vmatpush1.bf16.msra.mxu0 %v2396
        %2528 = vmatprep.subr.bf16.mxu0 %v2395
        %2529 = vmatpush1.bf16.msra.mxu0 %v2394
        %2530 = vmatprep.subr.bf16.mxu0 %v2393
        %2531 = vmatpush1.bf16.msra.mxu0 %v2392
        %2532 = vmatprep.subr.bf16.mxu0 %v2391
        %2533 = vmatpush1.bf16.msra.mxu0 %v2390
        %2534 = vmatprep.subr.bf16.mxu0 %v2421
        %2535 = vmatpush2.bf16.msra.mxu0 %v2420
        %2536 = vmatprep.subr.bf16.mxu0 %v2419
        %2537 = vmatpush2.bf16.msra.mxu0 %v2418
        %2538 = vmatprep.subr.bf16.mxu0 %v2417
        %2539 = vmatpush2.bf16.msra.mxu0 %v2416
        %2540 = vmatprep.subr.bf16.mxu0 %v2415
        %2541 = vmatpush2.bf16.msra.mxu0 %v2414
        %2542 = vmatprep.subr.bf16.mxu0 %v2413
        %2543 = vmatpush2.bf16.msra.mxu0 %v2412
        %2544 = vmatprep.subr.bf16.mxu0 %v2411
        %2545 = vmatpush2.bf16.msra.mxu0 %v2410
        %2546 = vmatprep.subr.bf16.mxu0 %v2409
        %2547 = vmatpush2.bf16.msra.mxu0 %v2408
        %2548 = vmatprep.subr.bf16.mxu0 %v2407
        %2549 = vmatpush2.bf16.msra.mxu0 %v2406
        %2550 = vmatprep.mubr.bf16.mxu0 %v2127
        %2551 = vmatmul.mubr.bf16.gmra.mxu0 %v2126
        %v2552 = vpop.f32.mrf.mxu0
        %v2553 = vadd.f32 0.0, %v2552
        %v2554 = vpop.f32.mrf.mxu0
        %v2555 = vadd.f32 0.0, %v2554
        %v2556 = vpop.f32.mrf.mxu0
        %v2557 = vadd.f32 0.0, %v2556
        %v2558 = vpop.f32.mrf.mxu0
        %v2559 = vadd.f32 0.0, %v2558
        %2560 = vmatprep.mubr.bf16.mxu0 %v2131
        %2561 = vmatmul.mubr.bf16.gmra.mxu0 %v2130
        %v2562 = vpop.f32.mrf.mxu0
        %v2563 = vadd.f32 0.0, %v2562
        %v2564 = vpop.f32.mrf.mxu0
        %v2565 = vadd.f32 0.0, %v2564
        %v2566 = vpop.f32.mrf.mxu0
        %v2567 = vadd.f32 0.0, %v2566
        %v2568 = vpop.f32.mrf.mxu0
        %v2569 = vadd.f32 0.0, %v2568
        %2570 = vdwg.mxu0
        %2571 = vmatprep.subr.bf16.mxu0 %v2437
        %2572 = vmatpush1.bf16.msra.mxu0 %v2436
        %2573 = vmatprep.subr.bf16.mxu0 %v2435
        %2574 = vmatpush1.bf16.msra.mxu0 %v2434
        %2575 = vmatprep.subr.bf16.mxu0 %v2433
        %2576 = vmatpush1.bf16.msra.mxu0 %v2432
        %2577 = vmatprep.subr.bf16.mxu0 %v2431
        %2578 = vmatpush1.bf16.msra.mxu0 %v2430
        %2579 = vmatprep.subr.bf16.mxu0 %v2429
        %2580 = vmatpush1.bf16.msra.mxu0 %v2428
        %2581 = vmatprep.subr.bf16.mxu0 %v2427
        %2582 = vmatpush1.bf16.msra.mxu0 %v2426
        %2583 = vmatprep.subr.bf16.mxu0 %v2425
        %2584 = vmatpush1.bf16.msra.mxu0 %v2424
        %2585 = vmatprep.subr.bf16.mxu0 %v2423
        %2586 = vmatpush1.bf16.msra.mxu0 %v2422
        %2587 = vmatprep.subr.bf16.mxu0 %v2453
        %2588 = vmatpush2.bf16.msra.mxu0 %v2452
        %2589 = vmatprep.subr.bf16.mxu0 %v2451
        %2590 = vmatpush2.bf16.msra.mxu0 %v2450
        %2591 = vmatprep.subr.bf16.mxu0 %v2449
        %2592 = vmatpush2.bf16.msra.mxu0 %v2448
        %2593 = vmatprep.subr.bf16.mxu0 %v2447
        %2594 = vmatpush2.bf16.msra.mxu0 %v2446
        %2595 = vmatprep.subr.bf16.mxu0 %v2445
        %2596 = vmatpush2.bf16.msra.mxu0 %v2444
        %2597 = vmatprep.subr.bf16.mxu0 %v2443
        %2598 = vmatpush2.bf16.msra.mxu0 %v2442
        %2599 = vmatprep.subr.bf16.mxu0 %v2441
        %2600 = vmatpush2.bf16.msra.mxu0 %v2440
        %2601 = vmatprep.subr.bf16.mxu0 %v2439
        %2602 = vmatpush2.bf16.msra.mxu0 %v2438
        %2603 = vmatprep.mubr.bf16.mxu0 %v2129
        %2604 = vmatmul.mubr.bf16.gmra.mxu0 %v2128
        %v2605 = vpop.f32.mrf.mxu0
        %v2606 = vadd.f32 %v2553, %v2605
        %v2607 = vpop.f32.mrf.mxu0
        %v2608 = vadd.f32 %v2555, %v2607
        %v2609 = vpop.f32.mrf.mxu0
        %v2610 = vadd.f32 %v2557, %v2609
        %v2611 = vpop.f32.mrf.mxu0
        %v2612 = vadd.f32 %v2559, %v2611
        %2613 = vmatprep.mubr.bf16.mxu0 %v2133
        %2614 = vmatmul.mubr.bf16.gmra.mxu0 %v2132
        %v2615 = vpop.f32.mrf.mxu0
        %v2616 = vadd.f32 %v2563, %v2615
        %v2617 = vpop.f32.mrf.mxu0
        %v2618 = vadd.f32 %v2565, %v2617
        %v2619 = vpop.f32.mrf.mxu0
        %v2620 = vadd.f32 %v2567, %v2619
        %v2621 = vpop.f32.mrf.mxu0
        %v2622 = vadd.f32 %v2569, %v2621
        %2623 = vdwg.mxu0
        %2624 = vst [vmem:[%s335] sm:$0xff] %v2606
        %2625 = vst.msk [vmem:[%s335 + $0x8] sm:$0xff] %vm665, %v2608
        %2626 = vst [vmem:[%s335 + $0x10] sm:$0xff] %v2610
        %2627 = vst.msk [vmem:[%s335 + $0x18] sm:$0xff] %vm665, %v2612
        %2628 = vst [vmem:[%s335 + $0x20] sm:$0xff] %v2616
        %2629 = vst.msk [vmem:[%s335 + $0x28] sm:$0xff] %vm665, %v2618
        %2630 = vst [vmem:[%s335 + $0x30] sm:$0xff] %v2620
        %2631 = vst.msk [vmem:[%s335 + $0x38] sm:$0xff] %vm665, %v2622
        %s2632 = sand.u32 %s188, 1
        %s2633 = scalar_lea.sflag [#allocation4], %s2632
        %s2634 = sand.u32 %s188, 1
        %s2635 = smul.addr %s2634, 64
        %s2636 = scalar_lea.vmem [#allocation7], %s2635
        %s2637 = sand.u32 %s214, 1
        %s2638 = scalar_lea.sflag [#allocation9], %s2637
        %s2639 = sand.u32 %s214, 1
        %s2640 = smul.addr %s2639, 32
        %s2641 = scalar_lea.vmem [#allocation8], %s2640
        // Predicated region
        $region57: #{encoder_sc_forward.1} parent=47 // pred_check
          %p2642 = pneg %p198
        $region58: #{encoder_sc_forward.1} parent=47 // pred_check_branch
          %2644 = sbr.rel (%p2642) target = $region60
        $region59: #{encoder_sc_forward.1} parent=47 // pred_region
          %s2645 = smul.u32 4, %s28
          %s2647 = ssub.s32 1024, 1024
          %2648 = vsyncadd %s2633, %s2647
          %s2649 = smul.addr %s2645, 2
          %s2650 = smul.addr %s2649, 128
          %s2651 = scalar_lea.hbm %s7, %s2650
          %s2652 = sshll.u32 %s2636, 4
          %s2653 = int_to_ptr.vmem [resolvable:$true] %s2652
          %2658 = dma.vmem_to_hbm [thread:$0]  %s2653, 1024, %s2651, %s2633, 256, 256, 16
        $region60: #{encoder_sc_forward.1} parent=47 // pred_fallthru
          _
        // Predicated region
        $region61: #{encoder_sc_forward.1} parent=47 // pred_check
          %p2659 = pneg %p224
        $region62: #{encoder_sc_forward.1} parent=47 // pred_check_branch
          %2661 = sbr.rel (%p2659) target = $region64
        $region63: #{encoder_sc_forward.1} parent=47 // pred_region
          %s2662 = smul.u32 4, %s28
          %s2664 = ssub.s32 512, 512
          %2665 = vsyncadd %s2638, %s2664
          %s2666 = smul.addr %s2662, 128
          %s2667 = scalar_lea.hbm %s8, %s2666
          %s2668 = sshll.u32 %s2641, 4
          %s2669 = int_to_ptr.vmem [resolvable:$true] %s2668
          %2674 = dma.vmem_to_hbm [thread:$0]  %s2669, 512, %s2667, %s2638, 128, 128, 8
        $region64: #{encoder_sc_forward.1} parent=47 // pred_fallthru
          _
      $region48: #{encoder_sc_forward.1} parent=5 // pred_fallthru
        _
      %p2675 = scmp.le.s32.totalorder 2, %s23
      // Predicated region
      $region65: #{encoder_sc_forward.1} parent=5 // pred_check
        %p2676 = pneg %p2675
      $region66: #{encoder_sc_forward.1} parent=5 // pred_check_branch
        %2678 = sbr.rel (%p2676) target = $region68
      $region67: #{encoder_sc_forward.1} parent=5 // pred_region
        %s2679 = ssub.s32 %s23, 2
        // Predicated region
        $region69: #{encoder_sc_forward.1} parent=67 // pred_check
          %p2680 = pneg %p204
        $region70: #{encoder_sc_forward.1} parent=67 // pred_check_branch
          %2682 = sbr.rel (%p2680) target = $region72
        $region71: #{encoder_sc_forward.1} parent=67 // pred_region
          %s2683 = sand.u32 %s189, 1
          %s2684 = scalar_lea.sflag [#allocation4], %s2683
          %s2685 = sand.u32 %s189, 1
          %s2686 = smul.addr %s2685, 64
          %s2687 = scalar_lea.vmem [#allocation7], %s2686
          %2688 = dma.done %s2684, 1024
        $region72: #{encoder_sc_forward.1} parent=67 // pred_fallthru
          _
        // Predicated region
        $region73: #{encoder_sc_forward.1} parent=67 // pred_check
          %p2689 = pneg %p230
        $region74: #{encoder_sc_forward.1} parent=67 // pred_check_branch
          %2691 = sbr.rel (%p2689) target = $region76
        $region75: #{encoder_sc_forward.1} parent=67 // pred_region
          %s2692 = sand.u32 %s215, 1
          %s2693 = scalar_lea.sflag [#allocation9], %s2692
          %s2694 = sand.u32 %s215, 1
          %s2695 = smul.addr %s2694, 32
          %s2696 = scalar_lea.vmem [#allocation8], %s2695
          %2697 = dma.done %s2693, 512
        $region76: #{encoder_sc_forward.1} parent=67 // pred_fallthru
          _
      $region68: #{encoder_sc_forward.1} parent=5 // pred_fallthru
        _
    $region6: #{encoder_sc_forward.1} parent=1 // loop_footer
      %s27 = sadd.s32 1, %s23
    $region7: #{encoder_sc_forward.1} parent=1 // loop_footer_branch
      %22 = sbr.rel target = $region3
    $region8: #{encoder_sc_forward.1} parent=1 // loop_exit
      _
    %2698 = vsyncpa [#allocation3], 1
    %s2699 = scalar_lea.sflag [#allocation3], 1
    %2700 = vsyncpa %s2699, 1
    %2701 = vsyncpa [#allocation6], 1
    %2702 = vsyncpa [#allocation4], 1
    %s2703 = scalar_lea.sflag [#allocation4], 1
    %2704 = vsyncpa %s2703, 1
    %2705 = vsyncpa [#allocation9], 1
    %s2706 = scalar_lea.sflag [#allocation9], 1
    %2707 = vsyncpa %s2706, 1

</llo_original>
